<compile_context>
chip_gen: v6e
topology: v6e:2x2x1
jax: 0.10.0
libtpu: 0.0.40
codegen_flags: <defaults>
</compile_context>

<pallas_src>
import jax
import jax.numpy as jnp
from jax import lax
from jax.experimental import pallas as pl
from jax.experimental.pallas import tpu as pltpu


GATE_PAD = 128                     # lanes per gate after padding (one full vreg width)
# PyTorch gate order is [i, f, g, o]; kernel order is [i, f, o, g] so the three
# sigmoid gates form one contiguous slab and tanh another.
_PT_TO_KERNEL = (0, 1, 3, 2)       # kernel gate k comes from PyTorch gate _PT_TO_KERNEL[k]


def _pad_gates(w_t, H):
    """w_t: (K, 4H) transposed weight/bias in PyTorch gate order ->
    (K, 4*GATE_PAD) in kernel order [i,f,o,g], each gate zero-padded to 128 lanes."""
    K = w_t.shape[0]
    out = jnp.zeros((K, 4 * GATE_PAD), jnp.float32)
    for k, src in enumerate(_PT_TO_KERNEL):
        out = out.at[:, k * GATE_PAD:k * GATE_PAD + H].set(w_t[:, src * H:(src + 1) * H])
    return out


def lstm_encoder_kernel(x_ref, wih1_ref, b1_ref, whh1_ref, w2_ref, b2_ref, out_ref):
    """Both LSTM layers, run over the full (short) sequence inside one kernel.

    x_ref    : (seq_len,)   SMEM       input sequence scalars (batch=1, n_features=1)
    wih1_ref : (1, 4*GP)    VMEM f32   layer-1 input weights, gate-padded
    b1_ref   : (1, 4*GP)    VMEM f32   layer-1 folded bias (b_ih + b_hh), gate-padded
    whh1_ref : (H1, 4*GP)   VMEM bf16  layer-1 recurrent weights, K depadded (H1=64)
    w2_ref   : (GP, 4*GP)   VMEM bf16  fused layer-2 weights:
                                       rows 0:H1   = Wih2 (gate-padded)
                                       rows H1:H1+H2 = Whh2 (gate-padded)
                                       rows H1+H2:GP = 0
    b2_ref   : (1, 4*GP)    VMEM f32   layer-2 folded bias, gate-padded
    out_ref  : (1, GP)      VMEM f32   final layer-2 hidden state (first H2 lanes valid)
    """
    seq_len = x_ref.shape[0]
    GP = GATE_PAD
    H1 = whh1_ref.shape[0]                     # layer-1 hidden size (64)

    # Hoist small loop-invariant loads (3 x 4 vregs).
    wih1 = wih1_ref[...]                       # (1, 4*GP) f32
    b1 = b1_ref[...]                           # (1, 4*GP) f32
    b2 = b2_ref[...]                           # (1, 4*GP) f32

    def cell(pre, c):
        # pre: (1, 4*GP) gate pre-activations, kernel gate order [i, f, o, g].
        # Padded lanes have pre == 0, so padded lanes of h/c remain exactly 0.
        sg = jax.nn.sigmoid(pre[:, :3 * GP])   # one contiguous sigmoid slab (i,f,o)
        g = jnp.tanh(pre[:, 3 * GP:])          # one contiguous tanh slab (g)
        i = sg[:, 0 * GP:1 * GP]
        f = sg[:, 1 * GP:2 * GP]
        o = sg[:, 2 * GP:3 * GP]
        c_new = f * c + i * g
        h_new = o * jnp.tanh(c_new)
        return h_new, c_new

    c1 = jnp.zeros((1, GP), jnp.float32)
    h2 = jnp.zeros((1, GP), jnp.float32)
    c2 = jnp.zeros((1, GP), jnp.float32)
    h1 = None

    # seq_len is small & static: fully unroll the serial recurrence so the LLO
    # scheduler can overlap layer-2 step t with layer-1 step t+1.
    for t in range(seq_len):
        # Layer-1 input projection: scalar * vector broadcast on the VPU.
        xb = x_ref[t] * wih1 + b1                                   # (1, 4*GP) f32
        if t == 0:
            pre1 = xb                                               # h1 == 0: skip dot
        else:
            # Depadded recurrent matmul: LHS = first H1 lanes of h1, K = H1 = 64.
            pre1 = xb + jnp.dot(h1[:, :H1].astype(jnp.bfloat16), whh1_ref[...],
                                preferred_element_type=jnp.float32)
        h1, c1 = cell(pre1, c1)

        # Layer 2: build the fused LHS without a lane-concatenate.
        # h1 valid lanes 0:H1 stay put; h2 valid lanes 0:H2 are rolled to H1:H1+H2
        # (XLU op, off the VALU path).  Padded lanes are exactly 0, so the add is exact.
        if t == 0:
            comb = h1                                               # h2 == 0: skip roll
        else:
            comb = h1 + pltpu.roll(h2, shift=H1, axis=1)
        pre2 = jnp.dot(comb.astype(jnp.bfloat16), w2_ref[...],
                       preferred_element_type=jnp.float32) + b2
        h2, c2 = cell(pre2, c2)

    out_ref[...] = h2                           # first embedding_dim lanes are the result


def make_raw_params(key, n_features, embedding_dim):
    """PyTorch-layout LSTM params, U(-1/sqrt(H), 1/sqrt(H)) init, gate order [i,f,g,o]."""
    hidden_dim = 2 * embedding_dim
    ks = jax.random.split(key, 8)

    def u(k, shape, H):
        bound = 1.0 / jnp.sqrt(jnp.float32(H))
        return jax.random.uniform(k, shape, jnp.float32, -bound, bound)

    w_ih1 = u(ks[0], (4 * hidden_dim, n_features), hidden_dim)
    w_hh1 = u(ks[1], (4 * hidden_dim, hidden_dim), hidden_dim)
    b_ih1 = u(ks[2], (4 * hidden_dim,), hidden_dim)
    b_hh1 = u(ks[3], (4 * hidden_dim,), hidden_dim)
    w_ih2 = u(ks[4], (4 * embedding_dim, hidden_dim), embedding_dim)
    w_hh2 = u(ks[5], (4 * embedding_dim, embedding_dim), embedding_dim)
    b_ih2 = u(ks[6], (4 * embedding_dim,), embedding_dim)
    b_hh2 = u(ks[7], (4 * embedding_dim,), embedding_dim)
    return (w_ih1, w_hh1, b_ih1, b_hh1, w_ih2, w_hh2, b_ih2, b_hh2)


def prepare_kernel_params(raw, n_features, embedding_dim):
    """Transpose, reorder gates to [i,f,o,g], pad each gate to 128 lanes, fold biases,
    depad the K (contraction) dimension, fuse layer-2 input+recurrent weights, and
    store the two large matrices in bf16."""
    H1 = 2 * embedding_dim
    H2 = embedding_dim
    assert n_features == 1, "kernel assumes n_features == 1"
    assert H1 <= GATE_PAD and H2 <= GATE_PAD, "gate padding assumes hidden sizes <= 128"
    assert H1 + H2 <= GATE_PAD, "roll-combine of (h1, h2) assumes H1 + H2 <= 128"
    w_ih1, w_hh1, b_ih1, b_hh1, w_ih2, w_hh2, b_ih2, b_hh2 = raw

    wih1_p = _pad_gates(w_ih1.T, H1)                                   # (1, 4*GP) f32
    b1_p = _pad_gates((b_ih1 + b_hh1)[None, :], H1)                    # (1, 4*GP) f32

    # Layer-1 recurrent weight, K depadded to H1 rows, bf16 storage.
    whh1_p = _pad_gates(w_hh1.T, H1).astype(jnp.bfloat16)              # (H1, 4*GP)

    # Fused layer-2 weight: rows [0:H1] multiply h1, rows [H1:H1+H2] multiply h2
    # (h2 is rolled into lanes H1:H1+H2 of the combined LHS in-kernel).
    w2_p = jnp.zeros((GATE_PAD, 4 * GATE_PAD), jnp.float32)
    w2_p = w2_p.at[:H1, :].set(_pad_gates(w_ih2.T, H2))
    w2_p = w2_p.at[H1:H1 + H2, :].set(_pad_gates(w_hh2.T, H2))
    w2_p = w2_p.astype(jnp.bfloat16)                                   # (GP, 4*GP)

    b2_p = _pad_gates((b_ih2 + b_hh2)[None, :], H2)                    # (1, 4*GP) f32

    return wih1_p, b1_p, whh1_p, w2_p, b2_p


def encoder_forward(x, kernel_params, seq_len, n_features, embedding_dim):
    """Pallas wrapper reproducing Encoder.forward.  x: (seq_len, n_features)."""
    assert n_features == 1, "PyTorch reshape of h_n requires n_features == 1"
    wih1_p, b1_p, whh1_p, w2_p, b2_p = kernel_params
    x_s = x.reshape(seq_len).astype(jnp.float32)        # (seq_len,) scalars -> SMEM

    h_n = pl.pallas_call(
        lstm_encoder_kernel,
        out_shape=jax.ShapeDtypeStruct((1, GATE_PAD), jnp.float32),
        in_specs=[
            pl.BlockSpec(memory_space=pltpu.SMEM),       # x scalars
            pl.BlockSpec(memory_space=pltpu.VMEM),       # wih1
            pl.BlockSpec(memory_space=pltpu.VMEM),       # b1
            pl.BlockSpec(memory_space=pltpu.VMEM),       # whh1 (bf16)
            pl.BlockSpec(memory_space=pltpu.VMEM),       # w2   (bf16)
            pl.BlockSpec(memory_space=pltpu.VMEM),       # b2
        ],
        out_specs=pl.BlockSpec(memory_space=pltpu.VMEM),
    )(x_s, wih1_p, b1_p, whh1_p, w2_p, b2_p)

    # hidden_n.reshape((n_features, embedding_dim)) in the PyTorch code.
    return h_n[:, :embedding_dim].reshape(n_features, embedding_dim)


def encoder_reference(x, raw_params, seq_len, n_features, embedding_dim):
    """Pure-JAX f32 reference using the raw PyTorch-layout weights (gate order [i,f,g,o])."""
    hidden_dim = 2 * embedding_dim
    w_ih1, w_hh1, b_ih1, b_hh1, w_ih2, w_hh2, b_ih2, b_hh2 = raw_params
    x = x.reshape(seq_len, n_features).astype(jnp.float32)

    def cell(x_t, h, c, w_ih, w_hh, b_ih, b_hh, H):
        g = x_t @ w_ih.T + h @ w_hh.T + b_ih + b_hh
        i = jax.nn.sigmoid(g[:, 0 * H:1 * H])
        f = jax.nn.sigmoid(g[:, 1 * H:2 * H])
        gg = jnp.tanh(g[:, 2 * H:3 * H])
        o = jax.nn.sigmoid(g[:, 3 * H:4 * H])
        c = f * c + i * gg
        h = o * jnp.tanh(c)
        return h, c

    def step(carry, x_t):
        h1, c1, h2, c2 = carry
        h1, c1 = cell(x_t[None, :], h1, c1, w_ih1, w_hh1, b_ih1, b_hh1, hidden_dim)
        h2, c2 = cell(h1, h2, c2, w_ih2, w_hh2, b_ih2, b_hh2, embedding_dim)
        return (h1, c1, h2, c2), None

    init = (jnp.zeros((1, hidden_dim)), jnp.zeros((1, hidden_dim)),
            jnp.zeros((1, embedding_dim)), jnp.zeros((1, embedding_dim)))
    (h1, c1, h2, c2), _ = lax.scan(step, init, x)
    return h2.reshape(n_features, embedding_dim)


if __name__ == "__main__":
    SEQ_LEN = 8
    N_FEATURES = 1          # required by the module's final reshape
    EMBEDDING_DIM = 32      # hidden_dim = 64

    key = jax.random.PRNGKey(0)
    k_x, k_p = jax.random.split(key)

    x = jax.random.normal(k_x, (SEQ_LEN, N_FEATURES), dtype=jnp.float32)
    raw = make_raw_params(k_p, N_FEATURES, EMBEDDING_DIM)
    kparams = prepare_kernel_params(raw, N_FEATURES, EMBEDDING_DIM)

    out = encoder_forward(x, kparams, SEQ_LEN, N_FEATURES, EMBEDDING_DIM)
    out = jax.block_until_ready(out)

    ref = encoder_reference(x, raw, SEQ_LEN, N_FEATURES, EMBEDDING_DIM)
    assert out.shape == (N_FEATURES, EMBEDDING_DIM)
    # Tolerance loosened (was 1e-4) because the recurrent/fused weights and the
    # matmul LHS are stored/fed in bf16; accumulation stays f32.
    assert jnp.allclose(out, ref, atol=2e-2, rtol=2e-2), "mismatch vs JAX reference"

    print("KERNEL_OK")
</pallas_src>

<mosaic_0001>
module attributes {stable_mosaic.version = 11 : i64} {
  func.func @lstm_encoder_kernel(%arg0: memref<8xf32, #tpu.memory_space<smem>>, %arg1: memref<1x512xf32, #tpu.memory_space<vmem>>, %arg2: memref<1x512xf32, #tpu.memory_space<vmem>>, %arg3: memref<64x512xbf16, #tpu.memory_space<vmem>>, %arg4: memref<128x512xbf16, #tpu.memory_space<vmem>>, %arg5: memref<1x512xf32, #tpu.memory_space<vmem>>, %arg6: memref<1x128xf32, #tpu.memory_space<vmem>>) attributes {dimension_semantics = [], scalar_prefetch = 0 : i64, scratch_operands = 0 : i64, tpu.core_type = #tpu.core_type<tc>} {
    %c0 = arith.constant 0 : index
    %c0_0 = arith.constant 0 : index
    %0 = vector.load %arg1[%c0, %c0_0] : memref<1x512xf32, #tpu.memory_space<vmem>>, vector<1x512xf32>
    %c0_1 = arith.constant 0 : index
    %c0_2 = arith.constant 0 : index
    %1 = vector.load %arg2[%c0_1, %c0_2] : memref<1x512xf32, #tpu.memory_space<vmem>>, vector<1x512xf32>
    %c0_3 = arith.constant 0 : index
    %c0_4 = arith.constant 0 : index
    %2 = vector.load %arg5[%c0_3, %c0_4] : memref<1x512xf32, #tpu.memory_space<vmem>>, vector<1x512xf32>
    %cst = arith.constant 0.000000e+00 : f32
    %3 = vector.broadcast %cst : f32 to vector<1x128xf32>
    %cst_5 = arith.constant 0.000000e+00 : f32
    %4 = vector.broadcast %cst_5 : f32 to vector<1x128xf32>
    %c0_6 = arith.constant 0 : index
    %5 = memref.load %arg0[%c0_6] : memref<8xf32, #tpu.memory_space<smem>>
    %6 = vector.broadcast %5 : f32 to vector<1x512xf32>
    %7 = arith.mulf %6, %0 : vector<1x512xf32>
    %8 = arith.addf %7, %1 : vector<1x512xf32>
    %9 = vector.extract_strided_slice %8 {offsets = [0, 0], sizes = [1, 384], strides = [1, 1]} : vector<1x512xf32> to vector<1x384xf32>
    %10 = arith.negf %9 : vector<1x384xf32>
    %11 = math.exp %10 : vector<1x384xf32>
    %cst_7 = arith.constant 1.000000e+00 : f32
    %12 = vector.broadcast %cst_7 : f32 to vector<1x384xf32>
    %13 = arith.addf %12, %11 : vector<1x384xf32>
    %14 = arith.divf %12, %13 : vector<1x384xf32>
    %15 = vector.extract_strided_slice %8 {offsets = [0, 384], sizes = [1, 128], strides = [1, 1]} : vector<1x512xf32> to vector<1x128xf32>
    %16 = math.tanh %15 : vector<1x128xf32>
    %17 = vector.extract_strided_slice %14 {offsets = [0, 0], sizes = [1, 128], strides = [1, 1]} : vector<1x384xf32> to vector<1x128xf32>
    %18 = vector.extract_strided_slice %14 {offsets = [0, 128], sizes = [1, 128], strides = [1, 1]} : vector<1x384xf32> to vector<1x128xf32>
    %19 = vector.extract_strided_slice %14 {offsets = [0, 256], sizes = [1, 128], strides = [1, 1]} : vector<1x384xf32> to vector<1x128xf32>
    %20 = arith.mulf %18, %3 : vector<1x128xf32>
    %21 = arith.mulf %17, %16 : vector<1x128xf32>
    %22 = arith.addf %20, %21 : vector<1x128xf32>
    %23 = math.tanh %22 : vector<1x128xf32>
    %24 = arith.mulf %19, %23 : vector<1x128xf32>
    %25 = arith.truncf %24 : vector<1x128xf32> to vector<1x128xbf16>
    %c0_8 = arith.constant 0 : index
    %c0_9 = arith.constant 0 : index
    %26 = vector.load %arg4[%c0_8, %c0_9] : memref<128x512xbf16, #tpu.memory_space<vmem>>, vector<128x512xbf16>
    %cst_10 = arith.constant dense<0.000000e+00> : vector<1x512xf32>
    %27 = tpu.matmul %25, %26, %cst_10 {dimension_numbers = #tpu.dot_dimension_numbers<[1], [0], [0], [1], [0, 0, 1, 1], [], []>} : vector<1x128xbf16>, vector<128x512xbf16>, vector<1x512xf32> -> vector<1x512xf32>
    %28 = arith.addf %27, %2 : vector<1x512xf32>
    %29 = vector.extract_strided_slice %28 {offsets = [0, 0], sizes = [1, 384], strides = [1, 1]} : vector<1x512xf32> to vector<1x384xf32>
    %30 = arith.negf %29 : vector<1x384xf32>
    %31 = math.exp %30 : vector<1x384xf32>
    %cst_11 = arith.constant 1.000000e+00 : f32
    %32 = vector.broadcast %cst_11 : f32 to vector<1x384xf32>
    %33 = arith.addf %32, %31 : vector<1x384xf32>
    %34 = arith.divf %32, %33 : vector<1x384xf32>
    %35 = vector.extract_strided_slice %28 {offsets = [0, 384], sizes = [1, 128], strides = [1, 1]} : vector<1x512xf32> to vector<1x128xf32>
    %36 = math.tanh %35 : vector<1x128xf32>
    %37 = vector.extract_strided_slice %34 {offsets = [0, 0], sizes = [1, 128], strides = [1, 1]} : vector<1x384xf32> to vector<1x128xf32>
    %38 = vector.extract_strided_slice %34 {offsets = [0, 128], sizes = [1, 128], strides = [1, 1]} : vector<1x384xf32> to vector<1x128xf32>
    %39 = vector.extract_strided_slice %34 {offsets = [0, 256], sizes = [1, 128], strides = [1, 1]} : vector<1x384xf32> to vector<1x128xf32>
    %40 = arith.mulf %38, %4 : vector<1x128xf32>
    %41 = arith.mulf %37, %36 : vector<1x128xf32>
    %42 = arith.addf %40, %41 : vector<1x128xf32>
    %43 = math.tanh %42 : vector<1x128xf32>
    %44 = arith.mulf %39, %43 : vector<1x128xf32>
    %c1 = arith.constant 1 : index
    %45 = memref.load %arg0[%c1] : memref<8xf32, #tpu.memory_space<smem>>
    %46 = vector.broadcast %45 : f32 to vector<1x512xf32>
    %47 = arith.mulf %46, %0 : vector<1x512xf32>
    %48 = arith.addf %47, %1 : vector<1x512xf32>
    %49 = vector.extract_strided_slice %24 {offsets = [0, 0], sizes = [1, 64], strides = [1, 1]} : vector<1x128xf32> to vector<1x64xf32>
    %50 = arith.truncf %49 : vector<1x64xf32> to vector<1x64xbf16>
    %c0_12 = arith.constant 0 : index
    %c0_13 = arith.constant 0 : index
    %51 = vector.load %arg3[%c0_12, %c0_13] : memref<64x512xbf16, #tpu.memory_space<vmem>>, vector<64x512xbf16>
    %cst_14 = arith.constant dense<0.000000e+00> : vector<1x512xf32>
    %52 = tpu.matmul %50, %51, %cst_14 {dimension_numbers = #tpu.dot_dimension_numbers<[1], [0], [0], [1], [0, 0, 1, 1], [], []>} : vector<1x64xbf16>, vector<64x512xbf16>, vector<1x512xf32> -> vector<1x512xf32>
    %53 = arith.addf %48, %52 : vector<1x512xf32>
    %54 = vector.extract_strided_slice %53 {offsets = [0, 0], sizes = [1, 384], strides = [1, 1]} : vector<1x512xf32> to vector<1x384xf32>
    %55 = arith.negf %54 : vector<1x384xf32>
    %56 = math.exp %55 : vector<1x384xf32>
    %cst_15 = arith.constant 1.000000e+00 : f32
    %57 = vector.broadcast %cst_15 : f32 to vector<1x384xf32>
    %58 = arith.addf %57, %56 : vector<1x384xf32>
    %59 = arith.divf %57, %58 : vector<1x384xf32>
    %60 = vector.extract_strided_slice %53 {offsets = [0, 384], sizes = [1, 128], strides = [1, 1]} : vector<1x512xf32> to vector<1x128xf32>
    %61 = math.tanh %60 : vector<1x128xf32>
    %62 = vector.extract_strided_slice %59 {offsets = [0, 0], sizes = [1, 128], strides = [1, 1]} : vector<1x384xf32> to vector<1x128xf32>
    %63 = vector.extract_strided_slice %59 {offsets = [0, 128], sizes = [1, 128], strides = [1, 1]} : vector<1x384xf32> to vector<1x128xf32>
    %64 = vector.extract_strided_slice %59 {offsets = [0, 256], sizes = [1, 128], strides = [1, 1]} : vector<1x384xf32> to vector<1x128xf32>
    %65 = arith.mulf %63, %22 : vector<1x128xf32>
    %66 = arith.mulf %62, %61 : vector<1x128xf32>
    %67 = arith.addf %65, %66 : vector<1x128xf32>
    %68 = math.tanh %67 : vector<1x128xf32>
    %69 = arith.mulf %64, %68 : vector<1x128xf32>
    %c64_i32 = arith.constant 64 : i32
    %70 = tpu.dynamic_rotate %44 by %c64_i32 dim 1 : vector<1x128xf32>, i32 -> vector<1x128xf32>
    %71 = arith.addf %69, %70 : vector<1x128xf32>
    %72 = arith.truncf %71 : vector<1x128xf32> to vector<1x128xbf16>
    %c0_16 = arith.constant 0 : index
    %c0_17 = arith.constant 0 : index
    %73 = vector.load %arg4[%c0_16, %c0_17] : memref<128x512xbf16, #tpu.memory_space<vmem>>, vector<128x512xbf16>
    %cst_18 = arith.constant dense<0.000000e+00> : vector<1x512xf32>
    %74 = tpu.matmul %72, %73, %cst_18 {dimension_numbers = #tpu.dot_dimension_numbers<[1], [0], [0], [1], [0, 0, 1, 1], [], []>} : vector<1x128xbf16>, vector<128x512xbf16>, vector<1x512xf32> -> vector<1x512xf32>
    %75 = arith.addf %74, %2 : vector<1x512xf32>
    %76 = vector.extract_strided_slice %75 {offsets = [0, 0], sizes = [1, 384], strides = [1, 1]} : vector<1x512xf32> to vector<1x384xf32>
    %77 = arith.negf %76 : vector<1x384xf32>
    %78 = math.exp %77 : vector<1x384xf32>
    %cst_19 = arith.constant 1.000000e+00 : f32
    %79 = vector.broadcast %cst_19 : f32 to vector<1x384xf32>
    %80 = arith.addf %79, %78 : vector<1x384xf32>
    %81 = arith.divf %79, %80 : vector<1x384xf32>
    %82 = vector.extract_strided_slice %75 {offsets = [0, 384], sizes = [1, 128], strides = [1, 1]} : vector<1x512xf32> to vector<1x128xf32>
    %83 = math.tanh %82 : vector<1x128xf32>
    %84 = vector.extract_strided_slice %81 {offsets = [0, 0], sizes = [1, 128], strides = [1, 1]} : vector<1x384xf32> to vector<1x128xf32>
    %85 = vector.extract_strided_slice %81 {offsets = [0, 128], sizes = [1, 128], strides = [1, 1]} : vector<1x384xf32> to vector<1x128xf32>
    %86 = vector.extract_strided_slice %81 {offsets = [0, 256], sizes = [1, 128], strides = [1, 1]} : vector<1x384xf32> to vector<1x128xf32>
    %87 = arith.mulf %85, %42 : vector<1x128xf32>
    %88 = arith.mulf %84, %83 : vector<1x128xf32>
    %89 = arith.addf %87, %88 : vector<1x128xf32>
    %90 = math.tanh %89 : vector<1x128xf32>
    %91 = arith.mulf %86, %90 : vector<1x128xf32>
    %c2 = arith.constant 2 : index
    %92 = memref.load %arg0[%c2] : memref<8xf32, #tpu.memory_space<smem>>
    %93 = vector.broadcast %92 : f32 to vector<1x512xf32>
    %94 = arith.mulf %93, %0 : vector<1x512xf32>
    %95 = arith.addf %94, %1 : vector<1x512xf32>
    %96 = vector.extract_strided_slice %69 {offsets = [0, 0], sizes = [1, 64], strides = [1, 1]} : vector<1x128xf32> to vector<1x64xf32>
    %97 = arith.truncf %96 : vector<1x64xf32> to vector<1x64xbf16>
    %c0_20 = arith.constant 0 : index
    %c0_21 = arith.constant 0 : index
    %98 = vector.load %arg3[%c0_20, %c0_21] : memref<64x512xbf16, #tpu.memory_space<vmem>>, vector<64x512xbf16>
    %cst_22 = arith.constant dense<0.000000e+00> : vector<1x512xf32>
    %99 = tpu.matmul %97, %98, %cst_22 {dimension_numbers = #tpu.dot_dimension_numbers<[1], [0], [0], [1], [0, 0, 1, 1], [], []>} : vector<1x64xbf16>, vector<64x512xbf16>, vector<1x512xf32> -> vector<1x512xf32>
    %100 = arith.addf %95, %99 : vector<1x512xf32>
    %101 = vector.extract_strided_slice %100 {offsets = [0, 0], sizes = [1, 384], strides = [1, 1]} : vector<1x512xf32> to vector<1x384xf32>
    %102 = arith.negf %101 : vector<1x384xf32>
    %103 = math.exp %102 : vector<1x384xf32>
    %cst_23 = arith.constant 1.000000e+00 : f32
    %104 = vector.broadcast %cst_23 : f32 to vector<1x384xf32>
    %105 = arith.addf %104, %103 : vector<1x384xf32>
    %106 = arith.divf %104, %105 : vector<1x384xf32>
    %107 = vector.extract_strided_slice %100 {offsets = [0, 384], sizes = [1, 128], strides = [1, 1]} : vector<1x512xf32> to vector<1x128xf32>
    %108 = math.tanh %107 : vector<1x128xf32>
    %109 = vector.extract_strided_slice %106 {offsets = [0, 0], sizes = [1, 128], strides = [1, 1]} : vector<1x384xf32> to vector<1x128xf32>
    %110 = vector.extract_strided_slice %106 {offsets = [0, 128], sizes = [1, 128], strides = [1, 1]} : vector<1x384xf32> to vector<1x128xf32>
    %111 = vector.extract_strided_slice %106 {offsets = [0, 256], sizes = [1, 128], strides = [1, 1]} : vector<1x384xf32> to vector<1x128xf32>
    %112 = arith.mulf %110, %67 : vector<1x128xf32>
    %113 = arith.mulf %109, %108 : vector<1x128xf32>
    %114 = arith.addf %112, %113 : vector<1x128xf32>
    %115 = math.tanh %114 : vector<1x128xf32>
    %116 = arith.mulf %111, %115 : vector<1x128xf32>
    %c64_i32_24 = arith.constant 64 : i32
    %117 = tpu.dynamic_rotate %91 by %c64_i32_24 dim 1 : vector<1x128xf32>, i32 -> vector<1x128xf32>
    %118 = arith.addf %116, %117 : vector<1x128xf32>
    %119 = arith.truncf %118 : vector<1x128xf32> to vector<1x128xbf16>
    %c0_25 = arith.constant 0 : index
    %c0_26 = arith.constant 0 : index
    %120 = vector.load %arg4[%c0_25, %c0_26] : memref<128x512xbf16, #tpu.memory_space<vmem>>, vector<128x512xbf16>
    %cst_27 = arith.constant dense<0.000000e+00> : vector<1x512xf32>
    %121 = tpu.matmul %119, %120, %cst_27 {dimension_numbers = #tpu.dot_dimension_numbers<[1], [0], [0], [1], [0, 0, 1, 1], [], []>} : vector<1x128xbf16>, vector<128x512xbf16>, vector<1x512xf32> -> vector<1x512xf32>
    %122 = arith.addf %121, %2 : vector<1x512xf32>
    %123 = vector.extract_strided_slice %122 {offsets = [0, 0], sizes = [1, 384], strides = [1, 1]} : vector<1x512xf32> to vector<1x384xf32>
    %124 = arith.negf %123 : vector<1x384xf32>
    %125 = math.exp %124 : vector<1x384xf32>
    %cst_28 = arith.constant 1.000000e+00 : f32
    %126 = vector.broadcast %cst_28 : f32 to vector<1x384xf32>
    %127 = arith.addf %126, %125 : vector<1x384xf32>
    %128 = arith.divf %126, %127 : vector<1x384xf32>
    %129 = vector.extract_strided_slice %122 {offsets = [0, 384], sizes = [1, 128], strides = [1, 1]} : vector<1x512xf32> to vector<1x128xf32>
    %130 = math.tanh %129 : vector<1x128xf32>
    %131 = vector.extract_strided_slice %128 {offsets = [0, 0], sizes = [1, 128], strides = [1, 1]} : vector<1x384xf32> to vector<1x128xf32>
    %132 = vector.extract_strided_slice %128 {offsets = [0, 128], sizes = [1, 128], strides = [1, 1]} : vector<1x384xf32> to vector<1x128xf32>
    %133 = vector.extract_strided_slice %128 {offsets = [0, 256], sizes = [1, 128], strides = [1, 1]} : vector<1x384xf32> to vector<1x128xf32>
    %134 = arith.mulf %132, %89 : vector<1x128xf32>
    %135 = arith.mulf %131, %130 : vector<1x128xf32>
    %136 = arith.addf %134, %135 : vector<1x128xf32>
    %137 = math.tanh %136 : vector<1x128xf32>
    %138 = arith.mulf %133, %137 : vector<1x128xf32>
    %c3 = arith.constant 3 : index
    %139 = memref.load %arg0[%c3] : memref<8xf32, #tpu.memory_space<smem>>
    %140 = vector.broadcast %139 : f32 to vector<1x512xf32>
    %141 = arith.mulf %140, %0 : vector<1x512xf32>
    %142 = arith.addf %141, %1 : vector<1x512xf32>
    %143 = vector.extract_strided_slice %116 {offsets = [0, 0], sizes = [1, 64], strides = [1, 1]} : vector<1x128xf32> to vector<1x64xf32>
    %144 = arith.truncf %143 : vector<1x64xf32> to vector<1x64xbf16>
    %c0_29 = arith.constant 0 : index
    %c0_30 = arith.constant 0 : index
    %145 = vector.load %arg3[%c0_29, %c0_30] : memref<64x512xbf16, #tpu.memory_space<vmem>>, vector<64x512xbf16>
    %cst_31 = arith.constant dense<0.000000e+00> : vector<1x512xf32>
    %146 = tpu.matmul %144, %145, %cst_31 {dimension_numbers = #tpu.dot_dimension_numbers<[1], [0], [0], [1], [0, 0, 1, 1], [], []>} : vector<1x64xbf16>, vector<64x512xbf16>, vector<1x512xf32> -> vector<1x512xf32>
    %147 = arith.addf %142, %146 : vector<1x512xf32>
    %148 = vector.extract_strided_slice %147 {offsets = [0, 0], sizes = [1, 384], strides = [1, 1]} : vector<1x512xf32> to vector<1x384xf32>
    %149 = arith.negf %148 : vector<1x384xf32>
    %150 = math.exp %149 : vector<1x384xf32>
    %cst_32 = arith.constant 1.000000e+00 : f32
    %151 = vector.broadcast %cst_32 : f32 to vector<1x384xf32>
    %152 = arith.addf %151, %150 : vector<1x384xf32>
    %153 = arith.divf %151, %152 : vector<1x384xf32>
    %154 = vector.extract_strided_slice %147 {offsets = [0, 384], sizes = [1, 128], strides = [1, 1]} : vector<1x512xf32> to vector<1x128xf32>
    %155 = math.tanh %154 : vector<1x128xf32>
    %156 = vector.extract_strided_slice %153 {offsets = [0, 0], sizes = [1, 128], strides = [1, 1]} : vector<1x384xf32> to vector<1x128xf32>
    %157 = vector.extract_strided_slice %153 {offsets = [0, 128], sizes = [1, 128], strides = [1, 1]} : vector<1x384xf32> to vector<1x128xf32>
    %158 = vector.extract_strided_slice %153 {offsets = [0, 256], sizes = [1, 128], strides = [1, 1]} : vector<1x384xf32> to vector<1x128xf32>
    %159 = arith.mulf %157, %114 : vector<1x128xf32>
    %160 = arith.mulf %156, %155 : vector<1x128xf32>
    %161 = arith.addf %159, %160 : vector<1x128xf32>
    %162 = math.tanh %161 : vector<1x128xf32>
    %163 = arith.mulf %158, %162 : vector<1x128xf32>
    %c64_i32_33 = arith.constant 64 : i32
    %164 = tpu.dynamic_rotate %138 by %c64_i32_33 dim 1 : vector<1x128xf32>, i32 -> vector<1x128xf32>
    %165 = arith.addf %163, %164 : vector<1x128xf32>
    %166 = arith.truncf %165 : vector<1x128xf32> to vector<1x128xbf16>
    %c0_34 = arith.constant 0 : index
    %c0_35 = arith.constant 0 : index
    %167 = vector.load %arg4[%c0_34, %c0_35] : memref<128x512xbf16, #tpu.memory_space<vmem>>, vector<128x512xbf16>
    %cst_36 = arith.constant dense<0.000000e+00> : vector<1x512xf32>
    %168 = tpu.matmul %166, %167, %cst_36 {dimension_numbers = #tpu.dot_dimension_numbers<[1], [0], [0], [1], [0, 0, 1, 1], [], []>} : vector<1x128xbf16>, vector<128x512xbf16>, vector<1x512xf32> -> vector<1x512xf32>
    %169 = arith.addf %168, %2 : vector<1x512xf32>
    %170 = vector.extract_strided_slice %169 {offsets = [0, 0], sizes = [1, 384], strides = [1, 1]} : vector<1x512xf32> to vector<1x384xf32>
    %171 = arith.negf %170 : vector<1x384xf32>
    %172 = math.exp %171 : vector<1x384xf32>
    %cst_37 = arith.constant 1.000000e+00 : f32
    %173 = vector.broadcast %cst_37 : f32 to vector<1x384xf32>
    %174 = arith.addf %173, %172 : vector<1x384xf32>
    %175 = arith.divf %173, %174 : vector<1x384xf32>
    %176 = vector.extract_strided_slice %169 {offsets = [0, 384], sizes = [1, 128], strides = [1, 1]} : vector<1x512xf32> to vector<1x128xf32>
    %177 = math.tanh %176 : vector<1x128xf32>
    %178 = vector.extract_strided_slice %175 {offsets = [0, 0], sizes = [1, 128], strides = [1, 1]} : vector<1x384xf32> to vector<1x128xf32>
    %179 = vector.extract_strided_slice %175 {offsets = [0, 128], sizes = [1, 128], strides = [1, 1]} : vector<1x384xf32> to vector<1x128xf32>
    %180 = vector.extract_strided_slice %175 {offsets = [0, 256], sizes = [1, 128], strides = [1, 1]} : vector<1x384xf32> to vector<1x128xf32>
    %181 = arith.mulf %179, %136 : vector<1x128xf32>
    %182 = arith.mulf %178, %177 : vector<1x128xf32>
    %183 = arith.addf %181, %182 : vector<1x128xf32>
    %184 = math.tanh %183 : vector<1x128xf32>
    %185 = arith.mulf %180, %184 : vector<1x128xf32>
    %c4 = arith.constant 4 : index
    %186 = memref.load %arg0[%c4] : memref<8xf32, #tpu.memory_space<smem>>
    %187 = vector.broadcast %186 : f32 to vector<1x512xf32>
    %188 = arith.mulf %187, %0 : vector<1x512xf32>
    %189 = arith.addf %188, %1 : vector<1x512xf32>
    %190 = vector.extract_strided_slice %163 {offsets = [0, 0], sizes = [1, 64], strides = [1, 1]} : vector<1x128xf32> to vector<1x64xf32>
    %191 = arith.truncf %190 : vector<1x64xf32> to vector<1x64xbf16>
    %c0_38 = arith.constant 0 : index
    %c0_39 = arith.constant 0 : index
    %192 = vector.load %arg3[%c0_38, %c0_39] : memref<64x512xbf16, #tpu.memory_space<vmem>>, vector<64x512xbf16>
    %cst_40 = arith.constant dense<0.000000e+00> : vector<1x512xf32>
    %193 = tpu.matmul %191, %192, %cst_40 {dimension_numbers = #tpu.dot_dimension_numbers<[1], [0], [0], [1], [0, 0, 1, 1], [], []>} : vector<1x64xbf16>, vector<64x512xbf16>, vector<1x512xf32> -> vector<1x512xf32>
    %194 = arith.addf %189, %193 : vector<1x512xf32>
    %195 = vector.extract_strided_slice %194 {offsets = [0, 0], sizes = [1, 384], strides = [1, 1]} : vector<1x512xf32> to vector<1x384xf32>
    %196 = arith.negf %195 : vector<1x384xf32>
    %197 = math.exp %196 : vector<1x384xf32>
    %cst_41 = arith.constant 1.000000e+00 : f32
    %198 = vector.broadcast %cst_41 : f32 to vector<1x384xf32>
    %199 = arith.addf %198, %197 : vector<1x384xf32>
    %200 = arith.divf %198, %199 : vector<1x384xf32>
    %201 = vector.extract_strided_slice %194 {offsets = [0, 384], sizes = [1, 128], strides = [1, 1]} : vector<1x512xf32> to vector<1x128xf32>
    %202 = math.tanh %201 : vector<1x128xf32>
    %203 = vector.extract_strided_slice %200 {offsets = [0, 0], sizes = [1, 128], strides = [1, 1]} : vector<1x384xf32> to vector<1x128xf32>
    %204 = vector.extract_strided_slice %200 {offsets = [0, 128], sizes = [1, 128], strides = [1, 1]} : vector<1x384xf32> to vector<1x128xf32>
    %205 = vector.extract_strided_slice %200 {offsets = [0, 256], sizes = [1, 128], strides = [1, 1]} : vector<1x384xf32> to vector<1x128xf32>
    %206 = arith.mulf %204, %161 : vector<1x128xf32>
    %207 = arith.mulf %203, %202 : vector<1x128xf32>
    %208 = arith.addf %206, %207 : vector<1x128xf32>
    %209 = math.tanh %208 : vector<1x128xf32>
    %210 = arith.mulf %205, %209 : vector<1x128xf32>
    %c64_i32_42 = arith.constant 64 : i32
    %211 = tpu.dynamic_rotate %185 by %c64_i32_42 dim 1 : vector<1x128xf32>, i32 -> vector<1x128xf32>
    %212 = arith.addf %210, %211 : vector<1x128xf32>
    %213 = arith.truncf %212 : vector<1x128xf32> to vector<1x128xbf16>
    %c0_43 = arith.constant 0 : index
    %c0_44 = arith.constant 0 : index
    %214 = vector.load %arg4[%c0_43, %c0_44] : memref<128x512xbf16, #tpu.memory_space<vmem>>, vector<128x512xbf16>
    %cst_45 = arith.constant dense<0.000000e+00> : vector<1x512xf32>
    %215 = tpu.matmul %213, %214, %cst_45 {dimension_numbers = #tpu.dot_dimension_numbers<[1], [0], [0], [1], [0, 0, 1, 1], [], []>} : vector<1x128xbf16>, vector<128x512xbf16>, vector<1x512xf32> -> vector<1x512xf32>
    %216 = arith.addf %215, %2 : vector<1x512xf32>
    %217 = vector.extract_strided_slice %216 {offsets = [0, 0], sizes = [1, 384], strides = [1, 1]} : vector<1x512xf32> to vector<1x384xf32>
    %218 = arith.negf %217 : vector<1x384xf32>
    %219 = math.exp %218 : vector<1x384xf32>
    %cst_46 = arith.constant 1.000000e+00 : f32
    %220 = vector.broadcast %cst_46 : f32 to vector<1x384xf32>
    %221 = arith.addf %220, %219 : vector<1x384xf32>
    %222 = arith.divf %220, %221 : vector<1x384xf32>
    %223 = vector.extract_strided_slice %216 {offsets = [0, 384], sizes = [1, 128], strides = [1, 1]} : vector<1x512xf32> to vector<1x128xf32>
    %224 = math.tanh %223 : vector<1x128xf32>
    %225 = vector.extract_strided_slice %222 {offsets = [0, 0], sizes = [1, 128], strides = [1, 1]} : vector<1x384xf32> to vector<1x128xf32>
    %226 = vector.extract_strided_slice %222 {offsets = [0, 128], sizes = [1, 128], strides = [1, 1]} : vector<1x384xf32> to vector<1x128xf32>
    %227 = vector.extract_strided_slice %222 {offsets = [0, 256], sizes = [1, 128], strides = [1, 1]} : vector<1x384xf32> to vector<1x128xf32>
    %228 = arith.mulf %226, %183 : vector<1x128xf32>
    %229 = arith.mulf %225, %224 : vector<1x128xf32>
    %230 = arith.addf %228, %229 : vector<1x128xf32>
    %231 = math.tanh %230 : vector<1x128xf32>
    %232 = arith.mulf %227, %231 : vector<1x128xf32>
    %c5 = arith.constant 5 : index
    %233 = memref.load %arg0[%c5] : memref<8xf32, #tpu.memory_space<smem>>
    %234 = vector.broadcast %233 : f32 to vector<1x512xf32>
    %235 = arith.mulf %234, %0 : vector<1x512xf32>
    %236 = arith.addf %235, %1 : vector<1x512xf32>
    %237 = vector.extract_strided_slice %210 {offsets = [0, 0], sizes = [1, 64], strides = [1, 1]} : vector<1x128xf32> to vector<1x64xf32>
    %238 = arith.truncf %237 : vector<1x64xf32> to vector<1x64xbf16>
    %c0_47 = arith.constant 0 : index
    %c0_48 = arith.constant 0 : index
    %239 = vector.load %arg3[%c0_47, %c0_48] : memref<64x512xbf16, #tpu.memory_space<vmem>>, vector<64x512xbf16>
    %cst_49 = arith.constant dense<0.000000e+00> : vector<1x512xf32>
    %240 = tpu.matmul %238, %239, %cst_49 {dimension_numbers = #tpu.dot_dimension_numbers<[1], [0], [0], [1], [0, 0, 1, 1], [], []>} : vector<1x64xbf16>, vector<64x512xbf16>, vector<1x512xf32> -> vector<1x512xf32>
    %241 = arith.addf %236, %240 : vector<1x512xf32>
    %242 = vector.extract_strided_slice %241 {offsets = [0, 0], sizes = [1, 384], strides = [1, 1]} : vector<1x512xf32> to vector<1x384xf32>
    %243 = arith.negf %242 : vector<1x384xf32>
    %244 = math.exp %243 : vector<1x384xf32>
    %cst_50 = arith.constant 1.000000e+00 : f32
    %245 = vector.broadcast %cst_50 : f32 to vector<1x384xf32>
    %246 = arith.addf %245, %244 : vector<1x384xf32>
    %247 = arith.divf %245, %246 : vector<1x384xf32>
    %248 = vector.extract_strided_slice %241 {offsets = [0, 384], sizes = [1, 128], strides = [1, 1]} : vector<1x512xf32> to vector<1x128xf32>
    %249 = math.tanh %248 : vector<1x128xf32>
    %250 = vector.extract_strided_slice %247 {offsets = [0, 0], sizes = [1, 128], strides = [1, 1]} : vector<1x384xf32> to vector<1x128xf32>
    %251 = vector.extract_strided_slice %247 {offsets = [0, 128], sizes = [1, 128], strides = [1, 1]} : vector<1x384xf32> to vector<1x128xf32>
    %252 = vector.extract_strided_slice %247 {offsets = [0, 256], sizes = [1, 128], strides = [1, 1]} : vector<1x384xf32> to vector<1x128xf32>
    %253 = arith.mulf %251, %208 : vector<1x128xf32>
    %254 = arith.mulf %250, %249 : vector<1x128xf32>
    %255 = arith.addf %253, %254 : vector<1x128xf32>
    %256 = math.tanh %255 : vector<1x128xf32>
    %257 = arith.mulf %252, %256 : vector<1x128xf32>
    %c64_i32_51 = arith.constant 64 : i32
    %258 = tpu.dynamic_rotate %232 by %c64_i32_51 dim 1 : vector<1x128xf32>, i32 -> vector<1x128xf32>
    %259 = arith.addf %257, %258 : vector<1x128xf32>
    %260 = arith.truncf %259 : vector<1x128xf32> to vector<1x128xbf16>
    %c0_52 = arith.constant 0 : index
    %c0_53 = arith.constant 0 : index
    %261 = vector.load %arg4[%c0_52, %c0_53] : memref<128x512xbf16, #tpu.memory_space<vmem>>, vector<128x512xbf16>
    %cst_54 = arith.constant dense<0.000000e+00> : vector<1x512xf32>
    %262 = tpu.matmul %260, %261, %cst_54 {dimension_numbers = #tpu.dot_dimension_numbers<[1], [0], [0], [1], [0, 0, 1, 1], [], []>} : vector<1x128xbf16>, vector<128x512xbf16>, vector<1x512xf32> -> vector<1x512xf32>
    %263 = arith.addf %262, %2 : vector<1x512xf32>
    %264 = vector.extract_strided_slice %263 {offsets = [0, 0], sizes = [1, 384], strides = [1, 1]} : vector<1x512xf32> to vector<1x384xf32>
    %265 = arith.negf %264 : vector<1x384xf32>
    %266 = math.exp %265 : vector<1x384xf32>
    %cst_55 = arith.constant 1.000000e+00 : f32
    %267 = vector.broadcast %cst_55 : f32 to vector<1x384xf32>
    %268 = arith.addf %267, %266 : vector<1x384xf32>
    %269 = arith.divf %267, %268 : vector<1x384xf32>
    %270 = vector.extract_strided_slice %263 {offsets = [0, 384], sizes = [1, 128], strides = [1, 1]} : vector<1x512xf32> to vector<1x128xf32>
    %271 = math.tanh %270 : vector<1x128xf32>
    %272 = vector.extract_strided_slice %269 {offsets = [0, 0], sizes = [1, 128], strides = [1, 1]} : vector<1x384xf32> to vector<1x128xf32>
    %273 = vector.extract_strided_slice %269 {offsets = [0, 128], sizes = [1, 128], strides = [1, 1]} : vector<1x384xf32> to vector<1x128xf32>
    %274 = vector.extract_strided_slice %269 {offsets = [0, 256], sizes = [1, 128], strides = [1, 1]} : vector<1x384xf32> to vector<1x128xf32>
    %275 = arith.mulf %273, %230 : vector<1x128xf32>
    %276 = arith.mulf %272, %271 : vector<1x128xf32>
    %277 = arith.addf %275, %276 : vector<1x128xf32>
    %278 = math.tanh %277 : vector<1x128xf32>
    %279 = arith.mulf %274, %278 : vector<1x128xf32>
    %c6 = arith.constant 6 : index
    %280 = memref.load %arg0[%c6] : memref<8xf32, #tpu.memory_space<smem>>
    %281 = vector.broadcast %280 : f32 to vector<1x512xf32>
    %282 = arith.mulf %281, %0 : vector<1x512xf32>
    %283 = arith.addf %282, %1 : vector<1x512xf32>
    %284 = vector.extract_strided_slice %257 {offsets = [0, 0], sizes = [1, 64], strides = [1, 1]} : vector<1x128xf32> to vector<1x64xf32>
    %285 = arith.truncf %284 : vector<1x64xf32> to vector<1x64xbf16>
    %c0_56 = arith.constant 0 : index
    %c0_57 = arith.constant 0 : index
    %286 = vector.load %arg3[%c0_56, %c0_57] : memref<64x512xbf16, #tpu.memory_space<vmem>>, vector<64x512xbf16>
    %cst_58 = arith.constant dense<0.000000e+00> : vector<1x512xf32>
    %287 = tpu.matmul %285, %286, %cst_58 {dimension_numbers = #tpu.dot_dimension_numbers<[1], [0], [0], [1], [0, 0, 1, 1], [], []>} : vector<1x64xbf16>, vector<64x512xbf16>, vector<1x512xf32> -> vector<1x512xf32>
    %288 = arith.addf %283, %287 : vector<1x512xf32>
    %289 = vector.extract_strided_slice %288 {offsets = [0, 0], sizes = [1, 384], strides = [1, 1]} : vector<1x512xf32> to vector<1x384xf32>
    %290 = arith.negf %289 : vector<1x384xf32>
    %291 = math.exp %290 : vector<1x384xf32>
    %cst_59 = arith.constant 1.000000e+00 : f32
    %292 = vector.broadcast %cst_59 : f32 to vector<1x384xf32>
    %293 = arith.addf %292, %291 : vector<1x384xf32>
    %294 = arith.divf %292, %293 : vector<1x384xf32>
    %295 = vector.extract_strided_slice %288 {offsets = [0, 384], sizes = [1, 128], strides = [1, 1]} : vector<1x512xf32> to vector<1x128xf32>
    %296 = math.tanh %295 : vector<1x128xf32>
    %297 = vector.extract_strided_slice %294 {offsets = [0, 0], sizes = [1, 128], strides = [1, 1]} : vector<1x384xf32> to vector<1x128xf32>
    %298 = vector.extract_strided_slice %294 {offsets = [0, 128], sizes = [1, 128], strides = [1, 1]} : vector<1x384xf32> to vector<1x128xf32>
    %299 = vector.extract_strided_slice %294 {offsets = [0, 256], sizes = [1, 128], strides = [1, 1]} : vector<1x384xf32> to vector<1x128xf32>
    %300 = arith.mulf %298, %255 : vector<1x128xf32>
    %301 = arith.mulf %297, %296 : vector<1x128xf32>
    %302 = arith.addf %300, %301 : vector<1x128xf32>
    %303 = math.tanh %302 : vector<1x128xf32>
    %304 = arith.mulf %299, %303 : vector<1x128xf32>
    %c64_i32_60 = arith.constant 64 : i32
    %305 = tpu.dynamic_rotate %279 by %c64_i32_60 dim 1 : vector<1x128xf32>, i32 -> vector<1x128xf32>
    %306 = arith.addf %304, %305 : vector<1x128xf32>
    %307 = arith.truncf %306 : vector<1x128xf32> to vector<1x128xbf16>
    %c0_61 = arith.constant 0 : index
    %c0_62 = arith.constant 0 : index
    %308 = vector.load %arg4[%c0_61, %c0_62] : memref<128x512xbf16, #tpu.memory_space<vmem>>, vector<128x512xbf16>
    %cst_63 = arith.constant dense<0.000000e+00> : vector<1x512xf32>
    %309 = tpu.matmul %307, %308, %cst_63 {dimension_numbers = #tpu.dot_dimension_numbers<[1], [0], [0], [1], [0, 0, 1, 1], [], []>} : vector<1x128xbf16>, vector<128x512xbf16>, vector<1x512xf32> -> vector<1x512xf32>
    %310 = arith.addf %309, %2 : vector<1x512xf32>
    %311 = vector.extract_strided_slice %310 {offsets = [0, 0], sizes = [1, 384], strides = [1, 1]} : vector<1x512xf32> to vector<1x384xf32>
    %312 = arith.negf %311 : vector<1x384xf32>
    %313 = math.exp %312 : vector<1x384xf32>
    %cst_64 = arith.constant 1.000000e+00 : f32
    %314 = vector.broadcast %cst_64 : f32 to vector<1x384xf32>
    %315 = arith.addf %314, %313 : vector<1x384xf32>
    %316 = arith.divf %314, %315 : vector<1x384xf32>
    %317 = vector.extract_strided_slice %310 {offsets = [0, 384], sizes = [1, 128], strides = [1, 1]} : vector<1x512xf32> to vector<1x128xf32>
    %318 = math.tanh %317 : vector<1x128xf32>
    %319 = vector.extract_strided_slice %316 {offsets = [0, 0], sizes = [1, 128], strides = [1, 1]} : vector<1x384xf32> to vector<1x128xf32>
    %320 = vector.extract_strided_slice %316 {offsets = [0, 128], sizes = [1, 128], strides = [1, 1]} : vector<1x384xf32> to vector<1x128xf32>
    %321 = vector.extract_strided_slice %316 {offsets = [0, 256], sizes = [1, 128], strides = [1, 1]} : vector<1x384xf32> to vector<1x128xf32>
    %322 = arith.mulf %320, %277 : vector<1x128xf32>
    %323 = arith.mulf %319, %318 : vector<1x128xf32>
    %324 = arith.addf %322, %323 : vector<1x128xf32>
    %325 = math.tanh %324 : vector<1x128xf32>
    %326 = arith.mulf %321, %325 : vector<1x128xf32>
    %c7 = arith.constant 7 : index
    %327 = memref.load %arg0[%c7] : memref<8xf32, #tpu.memory_space<smem>>
    %328 = vector.broadcast %327 : f32 to vector<1x512xf32>
    %329 = arith.mulf %328, %0 : vector<1x512xf32>
    %330 = arith.addf %329, %1 : vector<1x512xf32>
    %331 = vector.extract_strided_slice %304 {offsets = [0, 0], sizes = [1, 64], strides = [1, 1]} : vector<1x128xf32> to vector<1x64xf32>
    %332 = arith.truncf %331 : vector<1x64xf32> to vector<1x64xbf16>
    %c0_65 = arith.constant 0 : index
    %c0_66 = arith.constant 0 : index
    %333 = vector.load %arg3[%c0_65, %c0_66] : memref<64x512xbf16, #tpu.memory_space<vmem>>, vector<64x512xbf16>
    %cst_67 = arith.constant dense<0.000000e+00> : vector<1x512xf32>
    %334 = tpu.matmul %332, %333, %cst_67 {dimension_numbers = #tpu.dot_dimension_numbers<[1], [0], [0], [1], [0, 0, 1, 1], [], []>} : vector<1x64xbf16>, vector<64x512xbf16>, vector<1x512xf32> -> vector<1x512xf32>
    %335 = arith.addf %330, %334 : vector<1x512xf32>
    %336 = vector.extract_strided_slice %335 {offsets = [0, 0], sizes = [1, 384], strides = [1, 1]} : vector<1x512xf32> to vector<1x384xf32>
    %337 = arith.negf %336 : vector<1x384xf32>
    %338 = math.exp %337 : vector<1x384xf32>
    %cst_68 = arith.constant 1.000000e+00 : f32
    %339 = vector.broadcast %cst_68 : f32 to vector<1x384xf32>
    %340 = arith.addf %339, %338 : vector<1x384xf32>
    %341 = arith.divf %339, %340 : vector<1x384xf32>
    %342 = vector.extract_strided_slice %335 {offsets = [0, 384], sizes = [1, 128], strides = [1, 1]} : vector<1x512xf32> to vector<1x128xf32>
    %343 = math.tanh %342 : vector<1x128xf32>
    %344 = vector.extract_strided_slice %341 {offsets = [0, 0], sizes = [1, 128], strides = [1, 1]} : vector<1x384xf32> to vector<1x128xf32>
    %345 = vector.extract_strided_slice %341 {offsets = [0, 128], sizes = [1, 128], strides = [1, 1]} : vector<1x384xf32> to vector<1x128xf32>
    %346 = vector.extract_strided_slice %341 {offsets = [0, 256], sizes = [1, 128], strides = [1, 1]} : vector<1x384xf32> to vector<1x128xf32>
    %347 = arith.mulf %345, %302 : vector<1x128xf32>
    %348 = arith.mulf %344, %343 : vector<1x128xf32>
    %349 = arith.addf %347, %348 : vector<1x128xf32>
    %350 = math.tanh %349 : vector<1x128xf32>
    %351 = arith.mulf %346, %350 : vector<1x128xf32>
    %c64_i32_69 = arith.constant 64 : i32
    %352 = tpu.dynamic_rotate %326 by %c64_i32_69 dim 1 : vector<1x128xf32>, i32 -> vector<1x128xf32>
    %353 = arith.addf %351, %352 : vector<1x128xf32>
    %354 = arith.truncf %353 : vector<1x128xf32> to vector<1x128xbf16>
    %c0_70 = arith.constant 0 : index
    %c0_71 = arith.constant 0 : index
    %355 = vector.load %arg4[%c0_70, %c0_71] : memref<128x512xbf16, #tpu.memory_space<vmem>>, vector<128x512xbf16>
    %cst_72 = arith.constant dense<0.000000e+00> : vector<1x512xf32>
    %356 = tpu.matmul %354, %355, %cst_72 {dimension_numbers = #tpu.dot_dimension_numbers<[1], [0], [0], [1], [0, 0, 1, 1], [], []>} : vector<1x128xbf16>, vector<128x512xbf16>, vector<1x512xf32> -> vector<1x512xf32>
    %357 = arith.addf %356, %2 : vector<1x512xf32>
    %358 = vector.extract_strided_slice %357 {offsets = [0, 0], sizes = [1, 384], strides = [1, 1]} : vector<1x512xf32> to vector<1x384xf32>
    %359 = arith.negf %358 : vector<1x384xf32>
    %360 = math.exp %359 : vector<1x384xf32>
    %cst_73 = arith.constant 1.000000e+00 : f32
    %361 = vector.broadcast %cst_73 : f32 to vector<1x384xf32>
    %362 = arith.addf %361, %360 : vector<1x384xf32>
    %363 = arith.divf %361, %362 : vector<1x384xf32>
    %364 = vector.extract_strided_slice %357 {offsets = [0, 384], sizes = [1, 128], strides = [1, 1]} : vector<1x512xf32> to vector<1x128xf32>
    %365 = math.tanh %364 : vector<1x128xf32>
    %366 = vector.extract_strided_slice %363 {offsets = [0, 0], sizes = [1, 128], strides = [1, 1]} : vector<1x384xf32> to vector<1x128xf32>
    %367 = vector.extract_strided_slice %363 {offsets = [0, 128], sizes = [1, 128], strides = [1, 1]} : vector<1x384xf32> to vector<1x128xf32>
    %368 = vector.extract_strided_slice %363 {offsets = [0, 256], sizes = [1, 128], strides = [1, 1]} : vector<1x384xf32> to vector<1x128xf32>
    %369 = arith.mulf %367, %324 : vector<1x128xf32>
    %370 = arith.mulf %366, %365 : vector<1x128xf32>
    %371 = arith.addf %369, %370 : vector<1x128xf32>
    %372 = math.tanh %371 : vector<1x128xf32>
    %373 = arith.mulf %368, %372 : vector<1x128xf32>
    %c0_74 = arith.constant 0 : index
    %c0_75 = arith.constant 0 : index
    %374 = vector.load %arg6[%c0_74, %c0_75] : memref<1x128xf32, #tpu.memory_space<vmem>>, vector<1x128xf32>
    tpu.vector_store %arg6[%c0_74, %c0_75], %373 {strides = array<i32>} : memref<1x128xf32, #tpu.memory_space<vmem>>, vector<1x128xf32>,
    return
  }
}

</mosaic_0001>

<llo_original>
// kernel: tpu_custom_call.1
$region0: #{tpu_custom_call.1}
  #allocation0 [shape = 'u32[]', space=smem, size = 0x4, offset = 0x4, fixed_abs, tag = 'smem constant byte address 0x4 - core index']
  #allocation1 [shape = 'u32[144,128]{1,0:T(1,128)}', space=vmem, size = 0x12000, scoped, tag = 'internal scratch']
  %s0 = inlined_call_operand.hbm [shape: f32[8], index: 0, kind: input, shape index: {}]
  %s1 = inlined_call_operand.hbm [shape: f32[1,512], index: 1, kind: input, shape index: {}]
  %s2 = inlined_call_operand.hbm [shape: f32[1,512], index: 2, kind: input, shape index: {}]
  %s3 = inlined_call_operand.hbm [shape: bf16[64,512], index: 3, kind: input, shape index: {}]
  %s4 = inlined_call_operand.hbm [shape: bf16[128,512], index: 4, kind: input, shape index: {}]
  %s5 = inlined_call_operand.vmem [shape: f32[1,512], index: 5, kind: input, shape index: {}]
  %s6 = inlined_call_operand.hbm [shape: f32[1,128], index: 6, kind: output, shape index: {}]
  %s7 = sld [smem:[#allocation0]]
  $region54: #{tpu_custom_call.1} parent=0
    _
  %s9 = ssub.s32 1, %s7
  %s10 = scalar_select 0, %s9, %s7
  $region1: #{tpu_custom_call.1} parent=0
    #allocation2 [shape = 'u8[512]{0}', space=smem, size = 0x200, scoped, tag = 'input window, operand 0, single buffered']
    #allocation3 [shape = 's32[1]{0}', space=sflag, size = 0x4, scoped, tag = 'scoped memory for tpu_custom_call.1']
    #allocation4 [shape = 's32[1]{0}', space=sflag, size = 0x4, scoped, tag = 'scoped memory for tpu_custom_call.1']
    #allocation5 [shape = 's32[1]{0}', space=sflag, size = 0x4, scoped, tag = 'scoped memory for tpu_custom_call.1']
    #allocation6 [shape = 'u8[2048]{0}', space=vmem, size = 0x800, scoped, tag = 'input window, operand 1, single buffered']
    #allocation7 [shape = 'u8[2048]{0}', space=vmem, size = 0x800, scoped, tag = 'input window, operand 2, single buffered']
    #allocation8 [shape = 's32[1]{0}', space=sflag, size = 0x4, scoped, tag = 'scoped memory for tpu_custom_call.1']
    #allocation9 [shape = 'u8[65536]{0}', space=vmem, size = 0x10000, scoped, tag = 'input window, operand 3, single buffered']
    #allocation10 [shape = 'u8[131072]{0}', space=vmem, size = 0x20000, scoped, tag = 'input window, operand 4, single buffered']
    #allocation11 [shape = 's32[1]{0}', space=sflag, size = 0x4, scoped, tag = 'scoped memory for tpu_custom_call.1']
    #allocation12 [shape = 'u8[512]{0}', space=vmem, size = 0x400, scoped, tag = 'output window, operand 0, single buffered']
    %11 = vsyncpa [#allocation5], 0
    %12 = vsyncpa [#allocation3], 0
    %13 = vsyncpa [#allocation8], 0
    %14 = vsyncpa [#allocation11], 0
    %15 = vsyncpa [#allocation4], 0
    // Predicated region
    $region2: #{tpu_custom_call.1} parent=1 // pred_check
      _
    $region3: #{tpu_custom_call.1} parent=1 // pred_check_branch
      %17 = sbr.rel (0) target = $region5
    $region4: #{tpu_custom_call.1} parent=1 // pred_region
      %s19 = ssub.s32 16, 16
      %20 = vsyncadd [#allocation5], %s19
      %23 = dma.hbm_to_smem %s0, 16, [#allocation2], [#allocation5]
    $region5: #{tpu_custom_call.1} parent=1 // pred_fallthru
      _
    // Predicated region
    $region6: #{tpu_custom_call.1} parent=1 // pred_check
      _
    $region7: #{tpu_custom_call.1} parent=1 // pred_check_branch
      %25 = sbr.rel (0) target = $region9
    $region8: #{tpu_custom_call.1} parent=1 // pred_region
      %s27 = ssub.s32 64, 64
      %28 = vsyncadd [#allocation3], %s27
      %s30 = sshll.u32 [#allocation6], 4
      %s31 = int_to_ptr.vmem [resolvable:$true] %s30
      %33 = dma.hbm_to_vmem [thread:$0]  %s1, 64, %s31, [#allocation3]
    $region9: #{tpu_custom_call.1} parent=1 // pred_fallthru
      _
    // Predicated region
    $region10: #{tpu_custom_call.1} parent=1 // pred_check
      _
    $region11: #{tpu_custom_call.1} parent=1 // pred_check_branch
      %35 = sbr.rel (0) target = $region13
    $region12: #{tpu_custom_call.1} parent=1 // pred_region
      %s37 = ssub.s32 64, 64
      %38 = vsyncadd [#allocation8], %s37
      %s40 = sshll.u32 [#allocation7], 4
      %s41 = int_to_ptr.vmem [resolvable:$true] %s40
      %43 = dma.hbm_to_vmem [thread:$0]  %s2, 64, %s41, [#allocation8]
    $region13: #{tpu_custom_call.1} parent=1 // pred_fallthru
      _
    // Predicated region
    $region14: #{tpu_custom_call.1} parent=1 // pred_check
      _
    $region15: #{tpu_custom_call.1} parent=1 // pred_check_branch
      %45 = sbr.rel (0) target = $region17
    $region16: #{tpu_custom_call.1} parent=1 // pred_region
      %s47 = ssub.s32 2048, 2048
      %48 = vsyncadd [#allocation8], %s47
      %s49 = sshll.u32 [#allocation9], 4
      %s50 = int_to_ptr.vmem [resolvable:$true] %s49
      %55 = dma.hbm_to_vmem [thread:$0]  %s3, 2048, %s50, [#allocation8], 256, 256, 16
    $region17: #{tpu_custom_call.1} parent=1 // pred_fallthru
      _
    // Predicated region
    $region18: #{tpu_custom_call.1} parent=1 // pred_check
      _
    $region19: #{tpu_custom_call.1} parent=1 // pred_check_branch
      %57 = sbr.rel (0) target = $region21
    $region20: #{tpu_custom_call.1} parent=1 // pred_region
      %s59 = ssub.s32 4096, 4096
      %60 = vsyncadd [#allocation11], %s59
      %s61 = sshll.u32 [#allocation10], 4
      %s62 = int_to_ptr.vmem [resolvable:$true] %s61
      %67 = dma.hbm_to_vmem [thread:$0]  %s4, 4096, %s62, [#allocation11], 256, 256, 16
    $region21: #{tpu_custom_call.1} parent=1 // pred_fallthru
      _
    // Predicated region
    $region22: #{tpu_custom_call.1} parent=1 // pred_check
      _
    $region23: #{tpu_custom_call.1} parent=1 // pred_check_branch
      %69 = sbr.rel (0) target = $region25
    $region24: #{tpu_custom_call.1} parent=1 // pred_region
      _
    $region25: #{tpu_custom_call.1} parent=1 // pred_fallthru
      _
    // Predicated region
    $region26: #{tpu_custom_call.1} parent=1 // pred_check
      _
    $region27: #{tpu_custom_call.1} parent=1 // pred_check_branch
      %71 = sbr.rel (0) target = $region29
    $region28: #{tpu_custom_call.1} parent=1 // pred_region
      %72 = dma.done [#allocation5], 16
    $region29: #{tpu_custom_call.1} parent=1 // pred_fallthru
      _
    // Predicated region
    $region30: #{tpu_custom_call.1} parent=1 // pred_check
      _
    $region31: #{tpu_custom_call.1} parent=1 // pred_check_branch
      %74 = sbr.rel (0) target = $region33
    $region32: #{tpu_custom_call.1} parent=1 // pred_region
      %75 = dma.done [#allocation3], 64
    $region33: #{tpu_custom_call.1} parent=1 // pred_fallthru
      _
    // Predicated region
    $region34: #{tpu_custom_call.1} parent=1 // pred_check
      _
    $region35: #{tpu_custom_call.1} parent=1 // pred_check_branch
      %77 = sbr.rel (0) target = $region37
    $region36: #{tpu_custom_call.1} parent=1 // pred_region
      %78 = dma.done [#allocation8], 64
    $region37: #{tpu_custom_call.1} parent=1 // pred_fallthru
      _
    // Predicated region
    $region38: #{tpu_custom_call.1} parent=1 // pred_check
      _
    $region39: #{tpu_custom_call.1} parent=1 // pred_check_branch
      %80 = sbr.rel (0) target = $region41
    $region40: #{tpu_custom_call.1} parent=1 // pred_region
      %81 = dma.done [#allocation8], 2048
    $region41: #{tpu_custom_call.1} parent=1 // pred_fallthru
      _
    // Predicated region
    $region42: #{tpu_custom_call.1} parent=1 // pred_check
      _
    $region43: #{tpu_custom_call.1} parent=1 // pred_check_branch
      %83 = sbr.rel (0) target = $region45
    $region44: #{tpu_custom_call.1} parent=1 // pred_region
      %84 = dma.done [#allocation11], 4096
    $region45: #{tpu_custom_call.1} parent=1 // pred_fallthru
      _
    %85 = sfence
    %v87 = vld [vmem:[#allocation6] sm:$0xf]
    %v88 = vld [vmem:[#allocation7] sm:$0xf]
    %v89 = vld [vmem:[%s5] sm:$0xf]
    %s90 = sld [smem:[#allocation2]]
    %v91 = vstv %s90
    %v92 = vmul.f32 %v91, %v87
    %v93 = vadd.f32 %v92, %v88
    %v94 = vxor.u32 %v93, 2147483648
    %v95 = vmul.f32 %v94, 1.442695
    %v96 = vpow.pop %v95
    %v97 = vadd.f32 %v96, 1.0
    %v98 = vrcp.pop %v97
    %v99 = vmul.f32 1.0, %v98
    %v101 = vrot.slane %v93, 3
    %v103 = vtanh.pop %v101
    %v105 = vrot.slane %v99, 1
    %v107 = vmul.f32 %v105, 0.0
    %v108 = vmul.f32 %v99, %v103
    %v109 = vadd.f32 %v107, %v108
    %v110 = vtanh.pop %v109
    %v111 = vrot.slane %v99, 2
    %v113 = vmul.f32 %v111, %v110
    %v114 = vpack.c.bf16 %v113, %v113
    %v115 = vld [vmem:[#allocation10] sm:$0xff]
    %v116 = vld [vmem:[#allocation10 + $0x8] sm:$0xff]
    %v117 = vld [vmem:[#allocation10 + $0x10] sm:$0xff]
    %v118 = vld [vmem:[#allocation10 + $0x18] sm:$0xff]
    %v119 = vld [vmem:[#allocation10 + $0x20] sm:$0xff]
    %v120 = vld [vmem:[#allocation10 + $0x28] sm:$0xff]
    %v121 = vld [vmem:[#allocation10 + $0x30] sm:$0xff]
    %v122 = vld [vmem:[#allocation10 + $0x38] sm:$0xff]
    %v123 = vld [vmem:[#allocation10 + $0x40] sm:$0xff]
    %v124 = vld [vmem:[#allocation10 + $0x48] sm:$0xff]
    %v125 = vld [vmem:[#allocation10 + $0x50] sm:$0xff]
    %v126 = vld [vmem:[#allocation10 + $0x58] sm:$0xff]
    %v127 = vld [vmem:[#allocation10 + $0x60] sm:$0xff]
    %v128 = vld [vmem:[#allocation10 + $0x68] sm:$0xff]
    %v129 = vld [vmem:[#allocation10 + $0x70] sm:$0xff]
    %v130 = vld [vmem:[#allocation10 + $0x78] sm:$0xff]
    %v131 = vld [vmem:[#allocation10 + $0x80] sm:$0xff]
    %v132 = vld [vmem:[#allocation10 + $0x88] sm:$0xff]
    %v133 = vld [vmem:[#allocation10 + $0x90] sm:$0xff]
    %v134 = vld [vmem:[#allocation10 + $0x98] sm:$0xff]
    %v135 = vld [vmem:[#allocation10 + $0xa0] sm:$0xff]
    %v136 = vld [vmem:[#allocation10 + $0xa8] sm:$0xff]
    %v137 = vld [vmem:[#allocation10 + $0xb0] sm:$0xff]
    %v138 = vld [vmem:[#allocation10 + $0xb8] sm:$0xff]
    %v139 = vld [vmem:[#allocation10 + $0xc0] sm:$0xff]
    %v140 = vld [vmem:[#allocation10 + $0xc8] sm:$0xff]
    %v141 = vld [vmem:[#allocation10 + $0xd0] sm:$0xff]
    %v142 = vld [vmem:[#allocation10 + $0xd8] sm:$0xff]
    %v143 = vld [vmem:[#allocation10 + $0xe0] sm:$0xff]
    %v144 = vld [vmem:[#allocation10 + $0xe8] sm:$0xff]
    %v145 = vld [vmem:[#allocation10 + $0xf0] sm:$0xff]
    %v146 = vld [vmem:[#allocation10 + $0xf8] sm:$0xff]
    %v179 = vunpack.c.l.b16 %v115
    %v180 = vunpack.c.h.b16 %v115
    %v181 = vunpack.c.l.b16 %v116
    %v182 = vunpack.c.h.b16 %v116
    %v183 = vunpack.c.l.b16 %v117
    %v184 = vunpack.c.h.b16 %v117
    %v185 = vunpack.c.l.b16 %v118
    %v186 = vunpack.c.h.b16 %v118
    %v187 = vunpack.c.l.b16 %v119
    %v188 = vunpack.c.h.b16 %v119
    %v189 = vunpack.c.l.b16 %v120
    %v190 = vunpack.c.h.b16 %v120
    %v191 = vunpack.c.l.b16 %v121
    %v192 = vunpack.c.h.b16 %v121
    %v193 = vunpack.c.l.b16 %v122
    %v194 = vunpack.c.h.b16 %v122
    %v195 = vunpack.c.l.b16 %v123
    %v196 = vunpack.c.h.b16 %v123
    %v197 = vunpack.c.l.b16 %v124
    %v198 = vunpack.c.h.b16 %v124
    %v199 = vunpack.c.l.b16 %v125
    %v200 = vunpack.c.h.b16 %v125
    %v201 = vunpack.c.l.b16 %v126
    %v202 = vunpack.c.h.b16 %v126
    %v203 = vunpack.c.l.b16 %v127
    %v204 = vunpack.c.h.b16 %v127
    %v205 = vunpack.c.l.b16 %v128
    %v206 = vunpack.c.h.b16 %v128
    %v207 = vunpack.c.l.b16 %v129
    %v208 = vunpack.c.h.b16 %v129
    %v209 = vunpack.c.l.b16 %v130
    %v210 = vunpack.c.h.b16 %v130
    %v211 = vunpack.c.l.b16 %v131
    %v212 = vunpack.c.h.b16 %v131
    %v213 = vunpack.c.l.b16 %v132
    %v214 = vunpack.c.h.b16 %v132
    %v215 = vunpack.c.l.b16 %v133
    %v216 = vunpack.c.h.b16 %v133
    %v217 = vunpack.c.l.b16 %v134
    %v218 = vunpack.c.h.b16 %v134
    %v219 = vunpack.c.l.b16 %v135
    %v220 = vunpack.c.h.b16 %v135
    %v221 = vunpack.c.l.b16 %v136
    %v222 = vunpack.c.h.b16 %v136
    %v223 = vunpack.c.l.b16 %v137
    %v224 = vunpack.c.h.b16 %v137
    %v225 = vunpack.c.l.b16 %v138
    %v226 = vunpack.c.h.b16 %v138
    %v227 = vunpack.c.l.b16 %v139
    %v228 = vunpack.c.h.b16 %v139
    %v229 = vunpack.c.l.b16 %v140
    %v230 = vunpack.c.h.b16 %v140
    %v231 = vunpack.c.l.b16 %v141
    %v232 = vunpack.c.h.b16 %v141
    %v233 = vunpack.c.l.b16 %v142
    %v234 = vunpack.c.h.b16 %v142
    %v235 = vunpack.c.l.b16 %v143
    %v236 = vunpack.c.h.b16 %v143
    %v237 = vunpack.c.l.b16 %v144
    %v238 = vunpack.c.h.b16 %v144
    %v239 = vunpack.c.l.b16 %v145
    %v240 = vunpack.c.h.b16 %v145
    %v241 = vunpack.c.l.b16 %v146
    %v242 = vunpack.c.h.b16 %v146
    %v243 = vpack.c.b16 %v183, %v179
    %v244 = vpack.c.b16 %v184, %v180
    %v245 = vpack.c.b16 %v185, %v181
    %v246 = vpack.c.b16 %v186, %v182
    %v247 = vpack.c.b16 %v191, %v187
    %v248 = vpack.c.b16 %v192, %v188
    %v249 = vpack.c.b16 %v193, %v189
    %v250 = vpack.c.b16 %v194, %v190
    %v251 = vpack.c.b16 %v199, %v195
    %v252 = vpack.c.b16 %v200, %v196
    %v253 = vpack.c.b16 %v201, %v197
    %v254 = vpack.c.b16 %v202, %v198
    %v255 = vpack.c.b16 %v207, %v203
    %v256 = vpack.c.b16 %v208, %v204
    %v257 = vpack.c.b16 %v209, %v205
    %v258 = vpack.c.b16 %v210, %v206
    %v259 = vpack.c.b16 %v215, %v211
    %v260 = vpack.c.b16 %v216, %v212
    %v261 = vpack.c.b16 %v217, %v213
    %v262 = vpack.c.b16 %v218, %v214
    %v263 = vpack.c.b16 %v223, %v219
    %v264 = vpack.c.b16 %v224, %v220
    %v265 = vpack.c.b16 %v225, %v221
    %v266 = vpack.c.b16 %v226, %v222
    %v267 = vpack.c.b16 %v231, %v227
    %v268 = vpack.c.b16 %v232, %v228
    %v269 = vpack.c.b16 %v233, %v229
    %v270 = vpack.c.b16 %v234, %v230
    %v271 = vpack.c.b16 %v239, %v235
    %v272 = vpack.c.b16 %v240, %v236
    %v273 = vpack.c.b16 %v241, %v237
    %v274 = vpack.c.b16 %v242, %v238
    %v308 = vlaneseq
    %v309 = vshrl.u32 %v308, 7
    %v310 = vsub.s32 0, %v309
    %v311 = vrot.slane %v89, %v310
    %v312 = vlaneseq
    %v313 = vshrl.u32 %v312, 7
    %v314 = vsub.s32 1, %v313
    %v315 = vrot.slane %v89, %v314
    %v316 = vlaneseq
    %v317 = vshrl.u32 %v316, 7
    %v318 = vsub.s32 2, %v317
    %v319 = vrot.slane %v89, %v318
    %v320 = vlaneseq
    %v321 = vshrl.u32 %v320, 7
    %v322 = vsub.s32 3, %v321
    %v323 = vrot.slane %v89, %v322
    %328 = vmatprep.subr.bf16.mxu0 %v272
    %329 = vmatpush1.bf16.msra.mxu0 %v271
    %330 = vmatprep.subr.bf16.mxu0 %v268
    %331 = vmatpush1.bf16.msra.mxu0 %v267
    %332 = vmatprep.subr.bf16.mxu0 %v264
    %333 = vmatpush1.bf16.msra.mxu0 %v263
    %334 = vmatprep.subr.bf16.mxu0 %v260
    %335 = vmatpush1.bf16.msra.mxu0 %v259
    %336 = vmatprep.subr.bf16.mxu0 %v256
    %337 = vmatpush1.bf16.msra.mxu0 %v255
    %338 = vmatprep.subr.bf16.mxu0 %v252
    %339 = vmatpush1.bf16.msra.mxu0 %v251
    %340 = vmatprep.subr.bf16.mxu0 %v248
    %341 = vmatpush1.bf16.msra.mxu0 %v247
    %342 = vmatprep.subr.bf16.mxu0 %v244
    %343 = vmatpush1.bf16.msra.mxu0 %v243
    %344 = vmatprep.subr.bf16.mxu0 0
    %345 = vmatpush2.bf16.msra.mxu0 0
    %346 = vmatprep.subr.bf16.mxu0 0
    %347 = vmatpush2.bf16.msra.mxu0 0
    %348 = vmatprep.subr.bf16.mxu0 0
    %349 = vmatpush2.bf16.msra.mxu0 0
    %350 = vmatprep.subr.bf16.mxu0 0
    %351 = vmatpush2.bf16.msra.mxu0 0
    %352 = vmatprep.subr.bf16.mxu0 0
    %353 = vmatpush2.bf16.msra.mxu0 0
    %354 = vmatprep.subr.bf16.mxu0 0
    %355 = vmatpush2.bf16.msra.mxu0 0
    %356 = vmatprep.subr.bf16.mxu0 0
    %357 = vmatpush2.bf16.msra.mxu0 0
    %358 = vmatprep.subr.bf16.mxu0 0
    %359 = vmatpush2.bf16.msra.mxu0 0
    %360 = vmatprep.mubr.bf16.mxu0 0
    %361 = vmatmul.mubr.bf16.gmra.mxu0 %v114
    %v362 = vpop.f32.mrf.mxu0
    %v363 = vadd.f32 %v311, %v362
    %v364 = vpop.f32.mrf.mxu0
    %v365 = vadd.f32 %v315, %v364
    %v366 = vpop.f32.mrf.mxu0
    %v367 = vpop.f32.mrf.mxu0
    %368 = vdwg.mxu0
    %369 = vmatprep.subr.bf16.mxu0 %v274
    %370 = vmatpush1.bf16.msra.mxu0 %v273
    %371 = vmatprep.subr.bf16.mxu0 %v270
    %372 = vmatpush1.bf16.msra.mxu0 %v269
    %373 = vmatprep.subr.bf16.mxu0 %v266
    %374 = vmatpush1.bf16.msra.mxu0 %v265
    %375 = vmatprep.subr.bf16.mxu0 %v262
    %376 = vmatpush1.bf16.msra.mxu0 %v261
    %377 = vmatprep.subr.bf16.mxu0 %v258
    %378 = vmatpush1.bf16.msra.mxu0 %v257
    %379 = vmatprep.subr.bf16.mxu0 %v254
    %380 = vmatpush1.bf16.msra.mxu0 %v253
    %381 = vmatprep.subr.bf16.mxu0 %v250
    %382 = vmatpush1.bf16.msra.mxu0 %v249
    %383 = vmatprep.subr.bf16.mxu0 %v246
    %384 = vmatpush1.bf16.msra.mxu0 %v245
    %385 = vmatprep.subr.bf16.mxu0 0
    %386 = vmatpush2.bf16.msra.mxu0 0
    %387 = vmatprep.subr.bf16.mxu0 0
    %388 = vmatpush2.bf16.msra.mxu0 0
    %389 = vmatprep.subr.bf16.mxu0 0
    %390 = vmatpush2.bf16.msra.mxu0 0
    %391 = vmatprep.subr.bf16.mxu0 0
    %392 = vmatpush2.bf16.msra.mxu0 0
    %393 = vmatprep.subr.bf16.mxu0 0
    %394 = vmatpush2.bf16.msra.mxu0 0
    %395 = vmatprep.subr.bf16.mxu0 0
    %396 = vmatpush2.bf16.msra.mxu0 0
    %397 = vmatprep.subr.bf16.mxu0 0
    %398 = vmatpush2.bf16.msra.mxu0 0
    %399 = vmatprep.subr.bf16.mxu0 0
    %400 = vmatpush2.bf16.msra.mxu0 0
    %401 = vmatprep.mubr.bf16.mxu0 0
    %402 = vmatmul.mubr.bf16.gmra.mxu0 %v114
    %v403 = vpop.f32.mrf.mxu0
    %v404 = vadd.f32 %v319, %v403
    %v405 = vpop.f32.mrf.mxu0
    %v406 = vadd.f32 %v323, %v405
    %v407 = vpop.f32.mrf.mxu0
    %v408 = vpop.f32.mrf.mxu0
    %409 = vdwg.mxu0
    %v410 = vxor.u32 %v363, 2147483648
    %v411 = vxor.u32 %v365, 2147483648
    %v412 = vxor.u32 %v404, 2147483648
    %v413 = vmul.f32 %v410, 1.442695
    %v414 = vpow.pop %v413
    %v415 = vmul.f32 %v411, 1.442695
    %v416 = vpow.pop %v415
    %v417 = vmul.f32 %v412, 1.442695
    %v418 = vpow.pop %v417
    %v419 = vadd.f32 %v414, 1.0
    %v420 = vadd.f32 %v416, 1.0
    %v421 = vadd.f32 %v418, 1.0
    %v422 = vrcp.pop %v419
    %v423 = vmul.f32 1.0, %v422
    %v424 = vrcp.pop %v420
    %v425 = vmul.f32 1.0, %v424
    %v426 = vrcp.pop %v421
    %v427 = vmul.f32 1.0, %v426
    %v428 = vtanh.pop %v406
    %v429 = vmul.f32 %v425, 0.0
    %v430 = vmul.f32 %v423, %v428
    %v431 = vadd.f32 %v429, %v430
    %v432 = vtanh.pop %v431
    %v433 = vmul.f32 %v427, %v432
    %s434 = sld [smem:[#allocation2 + $0x1]]
    %v435 = vstv %s434
    %v436 = vmul.f32 %v435, %v87
    %v437 = vadd.f32 %v436, %v88
    %v438 = vld [vmem:[#allocation9] sm:$0xff]
    %v439 = vld [vmem:[#allocation9 + $0x8] sm:$0xff]
    %v440 = vld [vmem:[#allocation9 + $0x10] sm:$0xff]
    %v441 = vld [vmem:[#allocation9 + $0x18] sm:$0xff]
    %v442 = vld [vmem:[#allocation9 + $0x20] sm:$0xff]
    %v443 = vld [vmem:[#allocation9 + $0x28] sm:$0xff]
    %v444 = vld [vmem:[#allocation9 + $0x30] sm:$0xff]
    %v445 = vld [vmem:[#allocation9 + $0x38] sm:$0xff]
    %v446 = vld [vmem:[#allocation9 + $0x40] sm:$0xff]
    %v447 = vld [vmem:[#allocation9 + $0x48] sm:$0xff]
    %v448 = vld [vmem:[#allocation9 + $0x50] sm:$0xff]
    %v449 = vld [vmem:[#allocation9 + $0x58] sm:$0xff]
    %v450 = vld [vmem:[#allocation9 + $0x60] sm:$0xff]
    %v451 = vld [vmem:[#allocation9 + $0x68] sm:$0xff]
    %v452 = vld [vmem:[#allocation9 + $0x70] sm:$0xff]
    %v453 = vld [vmem:[#allocation9 + $0x78] sm:$0xff]
    %v470 = vunpack.c.l.b16 %v438
    %v471 = vunpack.c.h.b16 %v438
    %v472 = vunpack.c.l.b16 %v439
    %v473 = vunpack.c.h.b16 %v439
    %v474 = vunpack.c.l.b16 %v440
    %v475 = vunpack.c.h.b16 %v440
    %v476 = vunpack.c.l.b16 %v441
    %v477 = vunpack.c.h.b16 %v441
    %v478 = vunpack.c.l.b16 %v442
    %v479 = vunpack.c.h.b16 %v442
    %v480 = vunpack.c.l.b16 %v443
    %v481 = vunpack.c.h.b16 %v443
    %v482 = vunpack.c.l.b16 %v444
    %v483 = vunpack.c.h.b16 %v444
    %v484 = vunpack.c.l.b16 %v445
    %v485 = vunpack.c.h.b16 %v445
    %v486 = vunpack.c.l.b16 %v446
    %v487 = vunpack.c.h.b16 %v446
    %v488 = vunpack.c.l.b16 %v447
    %v489 = vunpack.c.h.b16 %v447
    %v490 = vunpack.c.l.b16 %v448
    %v491 = vunpack.c.h.b16 %v448
    %v492 = vunpack.c.l.b16 %v449
    %v493 = vunpack.c.h.b16 %v449
    %v494 = vunpack.c.l.b16 %v450
    %v495 = vunpack.c.h.b16 %v450
    %v496 = vunpack.c.l.b16 %v451
    %v497 = vunpack.c.h.b16 %v451
    %v498 = vunpack.c.l.b16 %v452
    %v499 = vunpack.c.h.b16 %v452
    %v500 = vunpack.c.l.b16 %v453
    %v501 = vunpack.c.h.b16 %v453
    %v502 = vpack.c.b16 %v474, %v470
    %v503 = vpack.c.b16 %v475, %v471
    %v504 = vpack.c.b16 %v476, %v472
    %v505 = vpack.c.b16 %v477, %v473
    %v506 = vpack.c.b16 %v482, %v478
    %v507 = vpack.c.b16 %v483, %v479
    %v508 = vpack.c.b16 %v484, %v480
    %v509 = vpack.c.b16 %v485, %v481
    %v510 = vpack.c.b16 %v490, %v486
    %v511 = vpack.c.b16 %v491, %v487
    %v512 = vpack.c.b16 %v492, %v488
    %v513 = vpack.c.b16 %v493, %v489
    %v514 = vpack.c.b16 %v498, %v494
    %v515 = vpack.c.b16 %v499, %v495
    %v516 = vpack.c.b16 %v500, %v496
    %v517 = vpack.c.b16 %v501, %v497
    %vm534 = vcmask 523264
    %v536 = vsel %vm534, %v114, 0
    %538 = vmatprep.subr.bf16.mxu0 0
    %539 = vmatpush1.bf16.msra.mxu0 0
    %540 = vmatprep.subr.bf16.mxu0 0
    %541 = vmatpush1.bf16.msra.mxu0 0
    %542 = vmatprep.subr.bf16.mxu0 0
    %543 = vmatpush1.bf16.msra.mxu0 0
    %544 = vmatprep.subr.bf16.mxu0 0
    %545 = vmatpush1.bf16.msra.mxu0 0
    %546 = vmatprep.subr.bf16.mxu0 %v515
    %547 = vmatpush1.bf16.msra.mxu0 %v514
    %548 = vmatprep.subr.bf16.mxu0 %v511
    %549 = vmatpush1.bf16.msra.mxu0 %v510
    %550 = vmatprep.subr.bf16.mxu0 %v507
    %551 = vmatpush1.bf16.msra.mxu0 %v506
    %552 = vmatprep.subr.bf16.mxu0 %v503
    %553 = vmatpush1.bf16.msra.mxu0 %v502
    %554 = vmatprep.subr.bf16.mxu0 0
    %555 = vmatpush2.bf16.msra.mxu0 0
    %556 = vmatprep.subr.bf16.mxu0 0
    %557 = vmatpush2.bf16.msra.mxu0 0
    %558 = vmatprep.subr.bf16.mxu0 0
    %559 = vmatpush2.bf16.msra.mxu0 0
    %560 = vmatprep.subr.bf16.mxu0 0
    %561 = vmatpush2.bf16.msra.mxu0 0
    %562 = vmatprep.subr.bf16.mxu0 0
    %563 = vmatpush2.bf16.msra.mxu0 0
    %564 = vmatprep.subr.bf16.mxu0 0
    %565 = vmatpush2.bf16.msra.mxu0 0
    %566 = vmatprep.subr.bf16.mxu0 0
    %567 = vmatpush2.bf16.msra.mxu0 0
    %568 = vmatprep.subr.bf16.mxu0 0
    %569 = vmatpush2.bf16.msra.mxu0 0
    %570 = vmatprep.mubr.bf16.mxu0 0
    %571 = vmatmul.mubr.bf16.gmra.mxu0 %v536
    %v572 = vpop.f32.mrf.mxu0
    %v573 = vadd.f32 0.0, %v572
    %v574 = vpop.f32.mrf.mxu0
    %v575 = vadd.f32 0.0, %v574
    %v576 = vpop.f32.mrf.mxu0
    %v577 = vpop.f32.mrf.mxu0
    %578 = vdwg.mxu0
    %579 = vmatprep.subr.bf16.mxu0 0
    %580 = vmatpush1.bf16.msra.mxu0 0
    %581 = vmatprep.subr.bf16.mxu0 0
    %582 = vmatpush1.bf16.msra.mxu0 0
    %583 = vmatprep.subr.bf16.mxu0 0
    %584 = vmatpush1.bf16.msra.mxu0 0
    %585 = vmatprep.subr.bf16.mxu0 0
    %586 = vmatpush1.bf16.msra.mxu0 0
    %587 = vmatprep.subr.bf16.mxu0 %v517
    %588 = vmatpush1.bf16.msra.mxu0 %v516
    %589 = vmatprep.subr.bf16.mxu0 %v513
    %590 = vmatpush1.bf16.msra.mxu0 %v512
    %591 = vmatprep.subr.bf16.mxu0 %v509
    %592 = vmatpush1.bf16.msra.mxu0 %v508
    %593 = vmatprep.subr.bf16.mxu0 %v505
    %594 = vmatpush1.bf16.msra.mxu0 %v504
    %595 = vmatprep.subr.bf16.mxu0 0
    %596 = vmatpush2.bf16.msra.mxu0 0
    %597 = vmatprep.subr.bf16.mxu0 0
    %598 = vmatpush2.bf16.msra.mxu0 0
    %599 = vmatprep.subr.bf16.mxu0 0
    %600 = vmatpush2.bf16.msra.mxu0 0
    %601 = vmatprep.subr.bf16.mxu0 0
    %602 = vmatpush2.bf16.msra.mxu0 0
    %603 = vmatprep.subr.bf16.mxu0 0
    %604 = vmatpush2.bf16.msra.mxu0 0
    %605 = vmatprep.subr.bf16.mxu0 0
    %606 = vmatpush2.bf16.msra.mxu0 0
    %607 = vmatprep.subr.bf16.mxu0 0
    %608 = vmatpush2.bf16.msra.mxu0 0
    %609 = vmatprep.subr.bf16.mxu0 0
    %610 = vmatpush2.bf16.msra.mxu0 0
    %611 = vmatprep.mubr.bf16.mxu0 0
    %612 = vmatmul.mubr.bf16.gmra.mxu0 %v536
    %v613 = vpop.f32.mrf.mxu0
    %v614 = vadd.f32 0.0, %v613
    %v615 = vpop.f32.mrf.mxu0
    %v616 = vadd.f32 0.0, %v615
    %v617 = vpop.f32.mrf.mxu0
    %v618 = vpop.f32.mrf.mxu0
    %619 = vdwg.mxu0
    %v624 = vcombine.low %v573, %v575
    %v625 = vcombine.low %v614, %v616
    %v627 = vunpack.c.l.s4 1966171168
    %v628 = vunpack.c.0.s8 %v627
    %v629 = vlaneseq
    %v630 = vshrl.u32 %v629, 7
    %v631 = vsub.s32 %v628, %v630
    %v632 = vrot.slane %v624, %v631
    %v634 = vunpack.c.l.s4 1966171168
    %v635 = vunpack.c.0.s8 %v634
    %v636 = vlaneseq
    %v637 = vshrl.u32 %v636, 7
    %v638 = vsub.s32 %v635, %v637
    %v639 = vrot.slane %v625, %v638
    %v640 = vcombine.low %v632, %v639
    %v642 = vunpack.c.l.s4 1966171168
    %v643 = vunpack.c.0.s8 %v642
    %v644 = vlaneseq
    %v645 = vshrl.u32 %v644, 7
    %v646 = vsub.s32 %v643, %v645
    %v647 = vrot.slane %v640, %v646
    %v649 = vadd.f32 %v437, %v647
    %v650 = vxor.u32 %v649, 2147483648
    %v651 = vmul.f32 %v650, 1.442695
    %v652 = vpow.pop %v651
    %v653 = vadd.f32 %v652, 1.0
    %v654 = vrcp.pop %v653
    %v655 = vmul.f32 1.0, %v654
    %v657 = vrot.slane %v649, 3
    %v659 = vtanh.pop %v657
    %v661 = vrot.slane %v655, 1
    %v663 = vmul.f32 %v661, %v109
    %v664 = vmul.f32 %v655, %v659
    %v665 = vadd.f32 %v663, %v664
    %v666 = vtanh.pop %v665
    %v667 = vrot.slane %v655, 2
    %v669 = vmul.f32 %v667, %v666
    %670 = vrot.lane.b32.xlu0 %v433, 64
    %v671 = vpop.permute.xlu0 %670
    %v672 = vadd.f32 %v669, %v671
    %v673 = vpack.c.bf16 %v672, %v672
    %674 = vmatprep.subr.bf16.mxu0 %v272
    %675 = vmatpush1.bf16.msra.mxu0 %v271
    %676 = vmatprep.subr.bf16.mxu0 %v268
    %677 = vmatpush1.bf16.msra.mxu0 %v267
    %678 = vmatprep.subr.bf16.mxu0 %v264
    %679 = vmatpush1.bf16.msra.mxu0 %v263
    %680 = vmatprep.subr.bf16.mxu0 %v260
    %681 = vmatpush1.bf16.msra.mxu0 %v259
    %682 = vmatprep.subr.bf16.mxu0 %v256
    %683 = vmatpush1.bf16.msra.mxu0 %v255
    %684 = vmatprep.subr.bf16.mxu0 %v252
    %685 = vmatpush1.bf16.msra.mxu0 %v251
    %686 = vmatprep.subr.bf16.mxu0 %v248
    %687 = vmatpush1.bf16.msra.mxu0 %v247
    %688 = vmatprep.subr.bf16.mxu0 %v244
    %689 = vmatpush1.bf16.msra.mxu0 %v243
    %690 = vmatprep.subr.bf16.mxu0 0
    %691 = vmatpush2.bf16.msra.mxu0 0
    %692 = vmatprep.subr.bf16.mxu0 0
    %693 = vmatpush2.bf16.msra.mxu0 0
    %694 = vmatprep.subr.bf16.mxu0 0
    %695 = vmatpush2.bf16.msra.mxu0 0
    %696 = vmatprep.subr.bf16.mxu0 0
    %697 = vmatpush2.bf16.msra.mxu0 0
    %698 = vmatprep.subr.bf16.mxu0 0
    %699 = vmatpush2.bf16.msra.mxu0 0
    %700 = vmatprep.subr.bf16.mxu0 0
    %701 = vmatpush2.bf16.msra.mxu0 0
    %702 = vmatprep.subr.bf16.mxu0 0
    %703 = vmatpush2.bf16.msra.mxu0 0
    %704 = vmatprep.subr.bf16.mxu0 0
    %705 = vmatpush2.bf16.msra.mxu0 0
    %706 = vmatprep.mubr.bf16.mxu0 0
    %707 = vmatmul.mubr.bf16.gmra.mxu0 %v673
    %v708 = vpop.f32.mrf.mxu0
    %v709 = vadd.f32 %v311, %v708
    %v710 = vpop.f32.mrf.mxu0
    %v711 = vadd.f32 %v315, %v710
    %v712 = vpop.f32.mrf.mxu0
    %v713 = vpop.f32.mrf.mxu0
    %714 = vdwg.mxu0
    %715 = vmatprep.subr.bf16.mxu0 %v274
    %716 = vmatpush1.bf16.msra.mxu0 %v273
    %717 = vmatprep.subr.bf16.mxu0 %v270
    %718 = vmatpush1.bf16.msra.mxu0 %v269
    %719 = vmatprep.subr.bf16.mxu0 %v266
    %720 = vmatpush1.bf16.msra.mxu0 %v265
    %721 = vmatprep.subr.bf16.mxu0 %v262
    %722 = vmatpush1.bf16.msra.mxu0 %v261
    %723 = vmatprep.subr.bf16.mxu0 %v258
    %724 = vmatpush1.bf16.msra.mxu0 %v257
    %725 = vmatprep.subr.bf16.mxu0 %v254
    %726 = vmatpush1.bf16.msra.mxu0 %v253
    %727 = vmatprep.subr.bf16.mxu0 %v250
    %728 = vmatpush1.bf16.msra.mxu0 %v249
    %729 = vmatprep.subr.bf16.mxu0 %v246
    %730 = vmatpush1.bf16.msra.mxu0 %v245
    %731 = vmatprep.subr.bf16.mxu0 0
    %732 = vmatpush2.bf16.msra.mxu0 0
    %733 = vmatprep.subr.bf16.mxu0 0
    %734 = vmatpush2.bf16.msra.mxu0 0
    %735 = vmatprep.subr.bf16.mxu0 0
    %736 = vmatpush2.bf16.msra.mxu0 0
    %737 = vmatprep.subr.bf16.mxu0 0
    %738 = vmatpush2.bf16.msra.mxu0 0
    %739 = vmatprep.subr.bf16.mxu0 0
    %740 = vmatpush2.bf16.msra.mxu0 0
    %741 = vmatprep.subr.bf16.mxu0 0
    %742 = vmatpush2.bf16.msra.mxu0 0
    %743 = vmatprep.subr.bf16.mxu0 0
    %744 = vmatpush2.bf16.msra.mxu0 0
    %745 = vmatprep.subr.bf16.mxu0 0
    %746 = vmatpush2.bf16.msra.mxu0 0
    %747 = vmatprep.mubr.bf16.mxu0 0
    %748 = vmatmul.mubr.bf16.gmra.mxu0 %v673
    %v749 = vpop.f32.mrf.mxu0
    %v750 = vadd.f32 %v319, %v749
    %v751 = vpop.f32.mrf.mxu0
    %v752 = vadd.f32 %v323, %v751
    %v753 = vpop.f32.mrf.mxu0
    %v754 = vpop.f32.mrf.mxu0
    %755 = vdwg.mxu0
    %v756 = vxor.u32 %v709, 2147483648
    %v757 = vxor.u32 %v711, 2147483648
    %v758 = vxor.u32 %v750, 2147483648
    %v759 = vmul.f32 %v756, 1.442695
    %v760 = vpow.pop %v759
    %v761 = vmul.f32 %v757, 1.442695
    %v762 = vpow.pop %v761
    %v763 = vmul.f32 %v758, 1.442695
    %v764 = vpow.pop %v763
    %v765 = vadd.f32 %v760, 1.0
    %v766 = vadd.f32 %v762, 1.0
    %v767 = vadd.f32 %v764, 1.0
    %v768 = vrcp.pop %v765
    %v769 = vmul.f32 1.0, %v768
    %v770 = vrcp.pop %v766
    %v771 = vmul.f32 1.0, %v770
    %v772 = vrcp.pop %v767
    %v773 = vmul.f32 1.0, %v772
    %v774 = vtanh.pop %v752
    %v775 = vmul.f32 %v771, %v431
    %v776 = vmul.f32 %v769, %v774
    %v777 = vadd.f32 %v775, %v776
    %v778 = vtanh.pop %v777
    %v779 = vmul.f32 %v773, %v778
    %s780 = sld [smem:[#allocation2 + $0x2]]
    %v781 = vstv %s780
    %v782 = vmul.f32 %v781, %v87
    %v783 = vadd.f32 %v782, %v88
    %v784 = vpack.c.bf16 %v669, %v669
    %v786 = vsel %vm534, %v784, 0
    %788 = vmatprep.subr.bf16.mxu0 0
    %789 = vmatpush1.bf16.msra.mxu0 0
    %790 = vmatprep.subr.bf16.mxu0 0
    %791 = vmatpush1.bf16.msra.mxu0 0
    %792 = vmatprep.subr.bf16.mxu0 0
    %793 = vmatpush1.bf16.msra.mxu0 0
    %794 = vmatprep.subr.bf16.mxu0 0
    %795 = vmatpush1.bf16.msra.mxu0 0
    %796 = vmatprep.subr.bf16.mxu0 %v515
    %797 = vmatpush1.bf16.msra.mxu0 %v514
    %798 = vmatprep.subr.bf16.mxu0 %v511
    %799 = vmatpush1.bf16.msra.mxu0 %v510
    %800 = vmatprep.subr.bf16.mxu0 %v507
    %801 = vmatpush1.bf16.msra.mxu0 %v506
    %802 = vmatprep.subr.bf16.mxu0 %v503
    %803 = vmatpush1.bf16.msra.mxu0 %v502
    %804 = vmatprep.subr.bf16.mxu0 0
    %805 = vmatpush2.bf16.msra.mxu0 0
    %806 = vmatprep.subr.bf16.mxu0 0
    %807 = vmatpush2.bf16.msra.mxu0 0
    %808 = vmatprep.subr.bf16.mxu0 0
    %809 = vmatpush2.bf16.msra.mxu0 0
    %810 = vmatprep.subr.bf16.mxu0 0
    %811 = vmatpush2.bf16.msra.mxu0 0
    %812 = vmatprep.subr.bf16.mxu0 0
    %813 = vmatpush2.bf16.msra.mxu0 0
    %814 = vmatprep.subr.bf16.mxu0 0
    %815 = vmatpush2.bf16.msra.mxu0 0
    %816 = vmatprep.subr.bf16.mxu0 0
    %817 = vmatpush2.bf16.msra.mxu0 0
    %818 = vmatprep.subr.bf16.mxu0 0
    %819 = vmatpush2.bf16.msra.mxu0 0
    %820 = vmatprep.mubr.bf16.mxu0 0
    %821 = vmatmul.mubr.bf16.gmra.mxu0 %v786
    %v822 = vpop.f32.mrf.mxu0
    %v823 = vadd.f32 0.0, %v822
    %v824 = vpop.f32.mrf.mxu0
    %v825 = vadd.f32 0.0, %v824
    %v826 = vpop.f32.mrf.mxu0
    %v827 = vpop.f32.mrf.mxu0
    %828 = vdwg.mxu0
    %829 = vmatprep.subr.bf16.mxu0 0
    %830 = vmatpush1.bf16.msra.mxu0 0
    %831 = vmatprep.subr.bf16.mxu0 0
    %832 = vmatpush1.bf16.msra.mxu0 0
    %833 = vmatprep.subr.bf16.mxu0 0
    %834 = vmatpush1.bf16.msra.mxu0 0
    %835 = vmatprep.subr.bf16.mxu0 0
    %836 = vmatpush1.bf16.msra.mxu0 0
    %837 = vmatprep.subr.bf16.mxu0 %v517
    %838 = vmatpush1.bf16.msra.mxu0 %v516
    %839 = vmatprep.subr.bf16.mxu0 %v513
    %840 = vmatpush1.bf16.msra.mxu0 %v512
    %841 = vmatprep.subr.bf16.mxu0 %v509
    %842 = vmatpush1.bf16.msra.mxu0 %v508
    %843 = vmatprep.subr.bf16.mxu0 %v505
    %844 = vmatpush1.bf16.msra.mxu0 %v504
    %845 = vmatprep.subr.bf16.mxu0 0
    %846 = vmatpush2.bf16.msra.mxu0 0
    %847 = vmatprep.subr.bf16.mxu0 0
    %848 = vmatpush2.bf16.msra.mxu0 0
    %849 = vmatprep.subr.bf16.mxu0 0
    %850 = vmatpush2.bf16.msra.mxu0 0
    %851 = vmatprep.subr.bf16.mxu0 0
    %852 = vmatpush2.bf16.msra.mxu0 0
    %853 = vmatprep.subr.bf16.mxu0 0
    %854 = vmatpush2.bf16.msra.mxu0 0
    %855 = vmatprep.subr.bf16.mxu0 0
    %856 = vmatpush2.bf16.msra.mxu0 0
    %857 = vmatprep.subr.bf16.mxu0 0
    %858 = vmatpush2.bf16.msra.mxu0 0
    %859 = vmatprep.subr.bf16.mxu0 0
    %860 = vmatpush2.bf16.msra.mxu0 0
    %861 = vmatprep.mubr.bf16.mxu0 0
    %862 = vmatmul.mubr.bf16.gmra.mxu0 %v786
    %v863 = vpop.f32.mrf.mxu0
    %v864 = vadd.f32 0.0, %v863
    %v865 = vpop.f32.mrf.mxu0
    %v866 = vadd.f32 0.0, %v865
    %v867 = vpop.f32.mrf.mxu0
    %v868 = vpop.f32.mrf.mxu0
    %869 = vdwg.mxu0
    %v874 = vcombine.low %v823, %v825
    %v875 = vcombine.low %v864, %v866
    %v877 = vunpack.c.l.s4 1966171168
    %v878 = vunpack.c.0.s8 %v877
    %v879 = vlaneseq
    %v880 = vshrl.u32 %v879, 7
    %v881 = vsub.s32 %v878, %v880
    %v882 = vrot.slane %v874, %v881
    %v884 = vunpack.c.l.s4 1966171168
    %v885 = vunpack.c.0.s8 %v884
    %v886 = vlaneseq
    %v887 = vshrl.u32 %v886, 7
    %v888 = vsub.s32 %v885, %v887
    %v889 = vrot.slane %v875, %v888
    %v890 = vcombine.low %v882, %v889
    %v892 = vunpack.c.l.s4 1966171168
    %v893 = vunpack.c.0.s8 %v892
    %v894 = vlaneseq
    %v895 = vshrl.u32 %v894, 7
    %v896 = vsub.s32 %v893, %v895
    %v897 = vrot.slane %v890, %v896
    %v899 = vadd.f32 %v783, %v897
    %v900 = vxor.u32 %v899, 2147483648
    %v901 = vmul.f32 %v900, 1.442695
    %v902 = vpow.pop %v901
    %v903 = vadd.f32 %v902, 1.0
    %v904 = vrcp.pop %v903
    %v905 = vmul.f32 1.0, %v904
    %v907 = vrot.slane %v899, 3
    %v909 = vtanh.pop %v907
    %v911 = vrot.slane %v905, 1
    %v913 = vmul.f32 %v911, %v665
    %v914 = vmul.f32 %v905, %v909
    %v915 = vadd.f32 %v913, %v914
    %v916 = vtanh.pop %v915
    %v917 = vrot.slane %v905, 2
    %v919 = vmul.f32 %v917, %v916
    %920 = vrot.lane.b32.xlu0 %v779, 64
    %v921 = vpop.permute.xlu0 %920
    %v922 = vadd.f32 %v919, %v921
    %v923 = vpack.c.bf16 %v922, %v922
    %924 = vmatprep.subr.bf16.mxu0 %v272
    %925 = vmatpush1.bf16.msra.mxu0 %v271
    %926 = vmatprep.subr.bf16.mxu0 %v268
    %927 = vmatpush1.bf16.msra.mxu0 %v267
    %928 = vmatprep.subr.bf16.mxu0 %v264
    %929 = vmatpush1.bf16.msra.mxu0 %v263
    %930 = vmatprep.subr.bf16.mxu0 %v260
    %931 = vmatpush1.bf16.msra.mxu0 %v259
    %932 = vmatprep.subr.bf16.mxu0 %v256
    %933 = vmatpush1.bf16.msra.mxu0 %v255
    %934 = vmatprep.subr.bf16.mxu0 %v252
    %935 = vmatpush1.bf16.msra.mxu0 %v251
    %936 = vmatprep.subr.bf16.mxu0 %v248
    %937 = vmatpush1.bf16.msra.mxu0 %v247
    %938 = vmatprep.subr.bf16.mxu0 %v244
    %939 = vmatpush1.bf16.msra.mxu0 %v243
    %940 = vmatprep.subr.bf16.mxu0 0
    %941 = vmatpush2.bf16.msra.mxu0 0
    %942 = vmatprep.subr.bf16.mxu0 0
    %943 = vmatpush2.bf16.msra.mxu0 0
    %944 = vmatprep.subr.bf16.mxu0 0
    %945 = vmatpush2.bf16.msra.mxu0 0
    %946 = vmatprep.subr.bf16.mxu0 0
    %947 = vmatpush2.bf16.msra.mxu0 0
    %948 = vmatprep.subr.bf16.mxu0 0
    %949 = vmatpush2.bf16.msra.mxu0 0
    %950 = vmatprep.subr.bf16.mxu0 0
    %951 = vmatpush2.bf16.msra.mxu0 0
    %952 = vmatprep.subr.bf16.mxu0 0
    %953 = vmatpush2.bf16.msra.mxu0 0
    %954 = vmatprep.subr.bf16.mxu0 0
    %955 = vmatpush2.bf16.msra.mxu0 0
    %956 = vmatprep.mubr.bf16.mxu0 0
    %957 = vmatmul.mubr.bf16.gmra.mxu0 %v923
    %v958 = vpop.f32.mrf.mxu0
    %v959 = vadd.f32 %v311, %v958
    %v960 = vpop.f32.mrf.mxu0
    %v961 = vadd.f32 %v315, %v960
    %v962 = vpop.f32.mrf.mxu0
    %v963 = vpop.f32.mrf.mxu0
    %964 = vdwg.mxu0
    %965 = vmatprep.subr.bf16.mxu0 %v274
    %966 = vmatpush1.bf16.msra.mxu0 %v273
    %967 = vmatprep.subr.bf16.mxu0 %v270
    %968 = vmatpush1.bf16.msra.mxu0 %v269
    %969 = vmatprep.subr.bf16.mxu0 %v266
    %970 = vmatpush1.bf16.msra.mxu0 %v265
    %971 = vmatprep.subr.bf16.mxu0 %v262
    %972 = vmatpush1.bf16.msra.mxu0 %v261
    %973 = vmatprep.subr.bf16.mxu0 %v258
    %974 = vmatpush1.bf16.msra.mxu0 %v257
    %975 = vmatprep.subr.bf16.mxu0 %v254
    %976 = vmatpush1.bf16.msra.mxu0 %v253
    %977 = vmatprep.subr.bf16.mxu0 %v250
    %978 = vmatpush1.bf16.msra.mxu0 %v249
    %979 = vmatprep.subr.bf16.mxu0 %v246
    %980 = vmatpush1.bf16.msra.mxu0 %v245
    %981 = vmatprep.subr.bf16.mxu0 0
    %982 = vmatpush2.bf16.msra.mxu0 0
    %983 = vmatprep.subr.bf16.mxu0 0
    %984 = vmatpush2.bf16.msra.mxu0 0
    %985 = vmatprep.subr.bf16.mxu0 0
    %986 = vmatpush2.bf16.msra.mxu0 0
    %987 = vmatprep.subr.bf16.mxu0 0
    %988 = vmatpush2.bf16.msra.mxu0 0
    %989 = vmatprep.subr.bf16.mxu0 0
    %990 = vmatpush2.bf16.msra.mxu0 0
    %991 = vmatprep.subr.bf16.mxu0 0
    %992 = vmatpush2.bf16.msra.mxu0 0
    %993 = vmatprep.subr.bf16.mxu0 0
    %994 = vmatpush2.bf16.msra.mxu0 0
    %995 = vmatprep.subr.bf16.mxu0 0
    %996 = vmatpush2.bf16.msra.mxu0 0
    %997 = vmatprep.mubr.bf16.mxu0 0
    %998 = vmatmul.mubr.bf16.gmra.mxu0 %v923
    %v999 = vpop.f32.mrf.mxu0
    %v1000 = vadd.f32 %v319, %v999
    %v1001 = vpop.f32.mrf.mxu0
    %v1002 = vadd.f32 %v323, %v1001
    %v1003 = vpop.f32.mrf.mxu0
    %v1004 = vpop.f32.mrf.mxu0
    %1005 = vdwg.mxu0
    %v1006 = vxor.u32 %v959, 2147483648
    %v1007 = vxor.u32 %v961, 2147483648
    %v1008 = vxor.u32 %v1000, 2147483648
    %v1009 = vmul.f32 %v1006, 1.442695
    %v1010 = vpow.pop %v1009
    %v1011 = vmul.f32 %v1007, 1.442695
    %v1012 = vpow.pop %v1011
    %v1013 = vmul.f32 %v1008, 1.442695
    %v1014 = vpow.pop %v1013
    %v1015 = vadd.f32 %v1010, 1.0
    %v1016 = vadd.f32 %v1012, 1.0
    %v1017 = vadd.f32 %v1014, 1.0
    %v1018 = vrcp.pop %v1015
    %v1019 = vmul.f32 1.0, %v1018
    %v1020 = vrcp.pop %v1016
    %v1021 = vmul.f32 1.0, %v1020
    %v1022 = vrcp.pop %v1017
    %v1023 = vmul.f32 1.0, %v1022
    %v1024 = vtanh.pop %v1002
    %v1025 = vmul.f32 %v1021, %v777
    %v1026 = vmul.f32 %v1019, %v1024
    %v1027 = vadd.f32 %v1025, %v1026
    %v1028 = vtanh.pop %v1027
    %v1029 = vmul.f32 %v1023, %v1028
    %s1030 = sld [smem:[#allocation2 + $0x3]]
    %v1031 = vstv %s1030
    %v1032 = vmul.f32 %v1031, %v87
    %v1033 = vadd.f32 %v1032, %v88
    %v1034 = vpack.c.bf16 %v919, %v919
    %v1036 = vsel %vm534, %v1034, 0
    %1038 = vmatprep.subr.bf16.mxu0 0
    %1039 = vmatpush1.bf16.msra.mxu0 0
    %1040 = vmatprep.subr.bf16.mxu0 0
    %1041 = vmatpush1.bf16.msra.mxu0 0
    %1042 = vmatprep.subr.bf16.mxu0 0
    %1043 = vmatpush1.bf16.msra.mxu0 0
    %1044 = vmatprep.subr.bf16.mxu0 0
    %1045 = vmatpush1.bf16.msra.mxu0 0
    %1046 = vmatprep.subr.bf16.mxu0 %v515
    %1047 = vmatpush1.bf16.msra.mxu0 %v514
    %1048 = vmatprep.subr.bf16.mxu0 %v511
    %1049 = vmatpush1.bf16.msra.mxu0 %v510
    %1050 = vmatprep.subr.bf16.mxu0 %v507
    %1051 = vmatpush1.bf16.msra.mxu0 %v506
    %1052 = vmatprep.subr.bf16.mxu0 %v503
    %1053 = vmatpush1.bf16.msra.mxu0 %v502
    %1054 = vmatprep.subr.bf16.mxu0 0
    %1055 = vmatpush2.bf16.msra.mxu0 0
    %1056 = vmatprep.subr.bf16.mxu0 0
    %1057 = vmatpush2.bf16.msra.mxu0 0
    %1058 = vmatprep.subr.bf16.mxu0 0
    %1059 = vmatpush2.bf16.msra.mxu0 0
    %1060 = vmatprep.subr.bf16.mxu0 0
    %1061 = vmatpush2.bf16.msra.mxu0 0
    %1062 = vmatprep.subr.bf16.mxu0 0
    %1063 = vmatpush2.bf16.msra.mxu0 0
    %1064 = vmatprep.subr.bf16.mxu0 0
    %1065 = vmatpush2.bf16.msra.mxu0 0
    %1066 = vmatprep.subr.bf16.mxu0 0
    %1067 = vmatpush2.bf16.msra.mxu0 0
    %1068 = vmatprep.subr.bf16.mxu0 0
    %1069 = vmatpush2.bf16.msra.mxu0 0
    %1070 = vmatprep.mubr.bf16.mxu0 0
    %1071 = vmatmul.mubr.bf16.gmra.mxu0 %v1036
    %v1072 = vpop.f32.mrf.mxu0
    %v1073 = vadd.f32 0.0, %v1072
    %v1074 = vpop.f32.mrf.mxu0
    %v1075 = vadd.f32 0.0, %v1074
    %v1076 = vpop.f32.mrf.mxu0
    %v1077 = vpop.f32.mrf.mxu0
    %1078 = vdwg.mxu0
    %1079 = vmatprep.subr.bf16.mxu0 0
    %1080 = vmatpush1.bf16.msra.mxu0 0
    %1081 = vmatprep.subr.bf16.mxu0 0
    %1082 = vmatpush1.bf16.msra.mxu0 0
    %1083 = vmatprep.subr.bf16.mxu0 0
    %1084 = vmatpush1.bf16.msra.mxu0 0
    %1085 = vmatprep.subr.bf16.mxu0 0
    %1086 = vmatpush1.bf16.msra.mxu0 0
    %1087 = vmatprep.subr.bf16.mxu0 %v517
    %1088 = vmatpush1.bf16.msra.mxu0 %v516
    %1089 = vmatprep.subr.bf16.mxu0 %v513
    %1090 = vmatpush1.bf16.msra.mxu0 %v512
    %1091 = vmatprep.subr.bf16.mxu0 %v509
    %1092 = vmatpush1.bf16.msra.mxu0 %v508
    %1093 = vmatprep.subr.bf16.mxu0 %v505
    %1094 = vmatpush1.bf16.msra.mxu0 %v504
    %1095 = vmatprep.subr.bf16.mxu0 0
    %1096 = vmatpush2.bf16.msra.mxu0 0
    %1097 = vmatprep.subr.bf16.mxu0 0
    %1098 = vmatpush2.bf16.msra.mxu0 0
    %1099 = vmatprep.subr.bf16.mxu0 0
    %1100 = vmatpush2.bf16.msra.mxu0 0
    %1101 = vmatprep.subr.bf16.mxu0 0
    %1102 = vmatpush2.bf16.msra.mxu0 0
    %1103 = vmatprep.subr.bf16.mxu0 0
    %1104 = vmatpush2.bf16.msra.mxu0 0
    %1105 = vmatprep.subr.bf16.mxu0 0
    %1106 = vmatpush2.bf16.msra.mxu0 0
    %1107 = vmatprep.subr.bf16.mxu0 0
    %1108 = vmatpush2.bf16.msra.mxu0 0
    %1109 = vmatprep.subr.bf16.mxu0 0
    %1110 = vmatpush2.bf16.msra.mxu0 0
    %1111 = vmatprep.mubr.bf16.mxu0 0
    %1112 = vmatmul.mubr.bf16.gmra.mxu0 %v1036
    %v1113 = vpop.f32.mrf.mxu0
    %v1114 = vadd.f32 0.0, %v1113
    %v1115 = vpop.f32.mrf.mxu0
    %v1116 = vadd.f32 0.0, %v1115
    %v1117 = vpop.f32.mrf.mxu0
    %v1118 = vpop.f32.mrf.mxu0
    %1119 = vdwg.mxu0
    %v1124 = vcombine.low %v1073, %v1075
    %v1125 = vcombine.low %v1114, %v1116
    %v1127 = vunpack.c.l.s4 1966171168
    %v1128 = vunpack.c.0.s8 %v1127
    %v1129 = vlaneseq
    %v1130 = vshrl.u32 %v1129, 7
    %v1131 = vsub.s32 %v1128, %v1130
    %v1132 = vrot.slane %v1124, %v1131
    %v1134 = vunpack.c.l.s4 1966171168
    %v1135 = vunpack.c.0.s8 %v1134
    %v1136 = vlaneseq
    %v1137 = vshrl.u32 %v1136, 7
    %v1138 = vsub.s32 %v1135, %v1137
    %v1139 = vrot.slane %v1125, %v1138
    %v1140 = vcombine.low %v1132, %v1139
    %v1142 = vunpack.c.l.s4 1966171168
    %v1143 = vunpack.c.0.s8 %v1142
    %v1144 = vlaneseq
    %v1145 = vshrl.u32 %v1144, 7
    %v1146 = vsub.s32 %v1143, %v1145
    %v1147 = vrot.slane %v1140, %v1146
    %v1149 = vadd.f32 %v1033, %v1147
    %v1150 = vxor.u32 %v1149, 2147483648
    %v1151 = vmul.f32 %v1150, 1.442695
    %v1152 = vpow.pop %v1151
    %v1153 = vadd.f32 %v1152, 1.0
    %v1154 = vrcp.pop %v1153
    %v1155 = vmul.f32 1.0, %v1154
    %v1157 = vrot.slane %v1149, 3
    %v1159 = vtanh.pop %v1157
    %v1161 = vrot.slane %v1155, 1
    %v1163 = vmul.f32 %v1161, %v915
    %v1164 = vmul.f32 %v1155, %v1159
    %v1165 = vadd.f32 %v1163, %v1164
    %v1166 = vtanh.pop %v1165
    %v1167 = vrot.slane %v1155, 2
    %v1169 = vmul.f32 %v1167, %v1166
    %1170 = vrot.lane.b32.xlu0 %v1029, 64
    %v1171 = vpop.permute.xlu0 %1170
    %v1172 = vadd.f32 %v1169, %v1171
    %v1173 = vpack.c.bf16 %v1172, %v1172
    %1174 = vmatprep.subr.bf16.mxu0 %v272
    %1175 = vmatpush1.bf16.msra.mxu0 %v271
    %1176 = vmatprep.subr.bf16.mxu0 %v268
    %1177 = vmatpush1.bf16.msra.mxu0 %v267
    %1178 = vmatprep.subr.bf16.mxu0 %v264
    %1179 = vmatpush1.bf16.msra.mxu0 %v263
    %1180 = vmatprep.subr.bf16.mxu0 %v260
    %1181 = vmatpush1.bf16.msra.mxu0 %v259
    %1182 = vmatprep.subr.bf16.mxu0 %v256
    %1183 = vmatpush1.bf16.msra.mxu0 %v255
    %1184 = vmatprep.subr.bf16.mxu0 %v252
    %1185 = vmatpush1.bf16.msra.mxu0 %v251
    %1186 = vmatprep.subr.bf16.mxu0 %v248
    %1187 = vmatpush1.bf16.msra.mxu0 %v247
    %1188 = vmatprep.subr.bf16.mxu0 %v244
    %1189 = vmatpush1.bf16.msra.mxu0 %v243
    %1190 = vmatprep.subr.bf16.mxu0 0
    %1191 = vmatpush2.bf16.msra.mxu0 0
    %1192 = vmatprep.subr.bf16.mxu0 0
    %1193 = vmatpush2.bf16.msra.mxu0 0
    %1194 = vmatprep.subr.bf16.mxu0 0
    %1195 = vmatpush2.bf16.msra.mxu0 0
    %1196 = vmatprep.subr.bf16.mxu0 0
    %1197 = vmatpush2.bf16.msra.mxu0 0
    %1198 = vmatprep.subr.bf16.mxu0 0
    %1199 = vmatpush2.bf16.msra.mxu0 0
    %1200 = vmatprep.subr.bf16.mxu0 0
    %1201 = vmatpush2.bf16.msra.mxu0 0
    %1202 = vmatprep.subr.bf16.mxu0 0
    %1203 = vmatpush2.bf16.msra.mxu0 0
    %1204 = vmatprep.subr.bf16.mxu0 0
    %1205 = vmatpush2.bf16.msra.mxu0 0
    %1206 = vmatprep.mubr.bf16.mxu0 0
    %1207 = vmatmul.mubr.bf16.gmra.mxu0 %v1173
    %v1208 = vpop.f32.mrf.mxu0
    %v1209 = vadd.f32 %v311, %v1208
    %v1210 = vpop.f32.mrf.mxu0
    %v1211 = vadd.f32 %v315, %v1210
    %v1212 = vpop.f32.mrf.mxu0
    %v1213 = vpop.f32.mrf.mxu0
    %1214 = vdwg.mxu0
    %1215 = vmatprep.subr.bf16.mxu0 %v274
    %1216 = vmatpush1.bf16.msra.mxu0 %v273
    %1217 = vmatprep.subr.bf16.mxu0 %v270
    %1218 = vmatpush1.bf16.msra.mxu0 %v269
    %1219 = vmatprep.subr.bf16.mxu0 %v266
    %1220 = vmatpush1.bf16.msra.mxu0 %v265
    %1221 = vmatprep.subr.bf16.mxu0 %v262
    %1222 = vmatpush1.bf16.msra.mxu0 %v261
    %1223 = vmatprep.subr.bf16.mxu0 %v258
    %1224 = vmatpush1.bf16.msra.mxu0 %v257
    %1225 = vmatprep.subr.bf16.mxu0 %v254
    %1226 = vmatpush1.bf16.msra.mxu0 %v253
    %1227 = vmatprep.subr.bf16.mxu0 %v250
    %1228 = vmatpush1.bf16.msra.mxu0 %v249
    %1229 = vmatprep.subr.bf16.mxu0 %v246
    %1230 = vmatpush1.bf16.msra.mxu0 %v245
    %1231 = vmatprep.subr.bf16.mxu0 0
    %1232 = vmatpush2.bf16.msra.mxu0 0
    %1233 = vmatprep.subr.bf16.mxu0 0
    %1234 = vmatpush2.bf16.msra.mxu0 0
    %1235 = vmatprep.subr.bf16.mxu0 0
    %1236 = vmatpush2.bf16.msra.mxu0 0
    %1237 = vmatprep.subr.bf16.mxu0 0
    %1238 = vmatpush2.bf16.msra.mxu0 0
    %1239 = vmatprep.subr.bf16.mxu0 0
    %1240 = vmatpush2.bf16.msra.mxu0 0
    %1241 = vmatprep.subr.bf16.mxu0 0
    %1242 = vmatpush2.bf16.msra.mxu0 0
    %1243 = vmatprep.subr.bf16.mxu0 0
    %1244 = vmatpush2.bf16.msra.mxu0 0
    %1245 = vmatprep.subr.bf16.mxu0 0
    %1246 = vmatpush2.bf16.msra.mxu0 0
    %1247 = vmatprep.mubr.bf16.mxu0 0
    %1248 = vmatmul.mubr.bf16.gmra.mxu0 %v1173
    %v1249 = vpop.f32.mrf.mxu0
    %v1250 = vadd.f32 %v319, %v1249
    %v1251 = vpop.f32.mrf.mxu0
    %v1252 = vadd.f32 %v323, %v1251
    %v1253 = vpop.f32.mrf.mxu0
    %v1254 = vpop.f32.mrf.mxu0
    %1255 = vdwg.mxu0
    %v1256 = vxor.u32 %v1209, 2147483648
    %v1257 = vxor.u32 %v1211, 2147483648
    %v1258 = vxor.u32 %v1250, 2147483648
    %v1259 = vmul.f32 %v1256, 1.442695
    %v1260 = vpow.pop %v1259
    %v1261 = vmul.f32 %v1257, 1.442695
    %v1262 = vpow.pop %v1261
    %v1263 = vmul.f32 %v1258, 1.442695
    %v1264 = vpow.pop %v1263
    %v1265 = vadd.f32 %v1260, 1.0
    %v1266 = vadd.f32 %v1262, 1.0
    %v1267 = vadd.f32 %v1264, 1.0
    %v1268 = vrcp.pop %v1265
    %v1269 = vmul.f32 1.0, %v1268
    %v1270 = vrcp.pop %v1266
    %v1271 = vmul.f32 1.0, %v1270
    %v1272 = vrcp.pop %v1267
    %v1273 = vmul.f32 1.0, %v1272
    %v1274 = vtanh.pop %v1252
    %v1275 = vmul.f32 %v1271, %v1027
    %v1276 = vmul.f32 %v1269, %v1274
    %v1277 = vadd.f32 %v1275, %v1276
    %v1278 = vtanh.pop %v1277
    %v1279 = vmul.f32 %v1273, %v1278
    %s1280 = sld [smem:[#allocation2 + $0x4]]
    %v1281 = vstv %s1280
    %v1282 = vmul.f32 %v1281, %v87
    %v1283 = vadd.f32 %v1282, %v88
    %v1284 = vpack.c.bf16 %v1169, %v1169
    %v1286 = vsel %vm534, %v1284, 0
    %1288 = vmatprep.subr.bf16.mxu0 0
    %1289 = vmatpush1.bf16.msra.mxu0 0
    %1290 = vmatprep.subr.bf16.mxu0 0
    %1291 = vmatpush1.bf16.msra.mxu0 0
    %1292 = vmatprep.subr.bf16.mxu0 0
    %1293 = vmatpush1.bf16.msra.mxu0 0
    %1294 = vmatprep.subr.bf16.mxu0 0
    %1295 = vmatpush1.bf16.msra.mxu0 0
    %1296 = vmatprep.subr.bf16.mxu0 %v515
    %1297 = vmatpush1.bf16.msra.mxu0 %v514
    %1298 = vmatprep.subr.bf16.mxu0 %v511
    %1299 = vmatpush1.bf16.msra.mxu0 %v510
    %1300 = vmatprep.subr.bf16.mxu0 %v507
    %1301 = vmatpush1.bf16.msra.mxu0 %v506
    %1302 = vmatprep.subr.bf16.mxu0 %v503
    %1303 = vmatpush1.bf16.msra.mxu0 %v502
    %1304 = vmatprep.subr.bf16.mxu0 0
    %1305 = vmatpush2.bf16.msra.mxu0 0
    %1306 = vmatprep.subr.bf16.mxu0 0
    %1307 = vmatpush2.bf16.msra.mxu0 0
    %1308 = vmatprep.subr.bf16.mxu0 0
    %1309 = vmatpush2.bf16.msra.mxu0 0
    %1310 = vmatprep.subr.bf16.mxu0 0
    %1311 = vmatpush2.bf16.msra.mxu0 0
    %1312 = vmatprep.subr.bf16.mxu0 0
    %1313 = vmatpush2.bf16.msra.mxu0 0
    %1314 = vmatprep.subr.bf16.mxu0 0
    %1315 = vmatpush2.bf16.msra.mxu0 0
    %1316 = vmatprep.subr.bf16.mxu0 0
    %1317 = vmatpush2.bf16.msra.mxu0 0
    %1318 = vmatprep.subr.bf16.mxu0 0
    %1319 = vmatpush2.bf16.msra.mxu0 0
    %1320 = vmatprep.mubr.bf16.mxu0 0
    %1321 = vmatmul.mubr.bf16.gmra.mxu0 %v1286
    %v1322 = vpop.f32.mrf.mxu0
    %v1323 = vadd.f32 0.0, %v1322
    %v1324 = vpop.f32.mrf.mxu0
    %v1325 = vadd.f32 0.0, %v1324
    %v1326 = vpop.f32.mrf.mxu0
    %v1327 = vpop.f32.mrf.mxu0
    %1328 = vdwg.mxu0
    %1329 = vmatprep.subr.bf16.mxu0 0
    %1330 = vmatpush1.bf16.msra.mxu0 0
    %1331 = vmatprep.subr.bf16.mxu0 0
    %1332 = vmatpush1.bf16.msra.mxu0 0
    %1333 = vmatprep.subr.bf16.mxu0 0
    %1334 = vmatpush1.bf16.msra.mxu0 0
    %1335 = vmatprep.subr.bf16.mxu0 0
    %1336 = vmatpush1.bf16.msra.mxu0 0
    %1337 = vmatprep.subr.bf16.mxu0 %v517
    %1338 = vmatpush1.bf16.msra.mxu0 %v516
    %1339 = vmatprep.subr.bf16.mxu0 %v513
    %1340 = vmatpush1.bf16.msra.mxu0 %v512
    %1341 = vmatprep.subr.bf16.mxu0 %v509
    %1342 = vmatpush1.bf16.msra.mxu0 %v508
    %1343 = vmatprep.subr.bf16.mxu0 %v505
    %1344 = vmatpush1.bf16.msra.mxu0 %v504
    %1345 = vmatprep.subr.bf16.mxu0 0
    %1346 = vmatpush2.bf16.msra.mxu0 0
    %1347 = vmatprep.subr.bf16.mxu0 0
    %1348 = vmatpush2.bf16.msra.mxu0 0
    %1349 = vmatprep.subr.bf16.mxu0 0
    %1350 = vmatpush2.bf16.msra.mxu0 0
    %1351 = vmatprep.subr.bf16.mxu0 0
    %1352 = vmatpush2.bf16.msra.mxu0 0
    %1353 = vmatprep.subr.bf16.mxu0 0
    %1354 = vmatpush2.bf16.msra.mxu0 0
    %1355 = vmatprep.subr.bf16.mxu0 0
    %1356 = vmatpush2.bf16.msra.mxu0 0
    %1357 = vmatprep.subr.bf16.mxu0 0
    %1358 = vmatpush2.bf16.msra.mxu0 0
    %1359 = vmatprep.subr.bf16.mxu0 0
    %1360 = vmatpush2.bf16.msra.mxu0 0
    %1361 = vmatprep.mubr.bf16.mxu0 0
    %1362 = vmatmul.mubr.bf16.gmra.mxu0 %v1286
    %v1363 = vpop.f32.mrf.mxu0
    %v1364 = vadd.f32 0.0, %v1363
    %v1365 = vpop.f32.mrf.mxu0
    %v1366 = vadd.f32 0.0, %v1365
    %v1367 = vpop.f32.mrf.mxu0
    %v1368 = vpop.f32.mrf.mxu0
    %1369 = vdwg.mxu0
    %v1374 = vcombine.low %v1323, %v1325
    %v1375 = vcombine.low %v1364, %v1366
    %v1377 = vunpack.c.l.s4 1966171168
    %v1378 = vunpack.c.0.s8 %v1377
    %v1379 = vlaneseq
    %v1380 = vshrl.u32 %v1379, 7
    %v1381 = vsub.s32 %v1378, %v1380
    %v1382 = vrot.slane %v1374, %v1381
    %v1384 = vunpack.c.l.s4 1966171168
    %v1385 = vunpack.c.0.s8 %v1384
    %v1386 = vlaneseq
    %v1387 = vshrl.u32 %v1386, 7
    %v1388 = vsub.s32 %v1385, %v1387
    %v1389 = vrot.slane %v1375, %v1388
    %v1390 = vcombine.low %v1382, %v1389
    %v1392 = vunpack.c.l.s4 1966171168
    %v1393 = vunpack.c.0.s8 %v1392
    %v1394 = vlaneseq
    %v1395 = vshrl.u32 %v1394, 7
    %v1396 = vsub.s32 %v1393, %v1395
    %v1397 = vrot.slane %v1390, %v1396
    %v1399 = vadd.f32 %v1283, %v1397
    %v1400 = vxor.u32 %v1399, 2147483648
    %v1401 = vmul.f32 %v1400, 1.442695
    %v1402 = vpow.pop %v1401
    %v1403 = vadd.f32 %v1402, 1.0
    %v1404 = vrcp.pop %v1403
    %v1405 = vmul.f32 1.0, %v1404
    %v1407 = vrot.slane %v1399, 3
    %v1409 = vtanh.pop %v1407
    %v1411 = vrot.slane %v1405, 1
    %v1413 = vmul.f32 %v1411, %v1165
    %v1414 = vmul.f32 %v1405, %v1409
    %v1415 = vadd.f32 %v1413, %v1414
    %v1416 = vtanh.pop %v1415
    %v1417 = vrot.slane %v1405, 2
    %v1419 = vmul.f32 %v1417, %v1416
    %1420 = vrot.lane.b32.xlu0 %v1279, 64
    %v1421 = vpop.permute.xlu0 %1420
    %v1422 = vadd.f32 %v1419, %v1421
    %v1423 = vpack.c.bf16 %v1422, %v1422
    %1424 = vmatprep.subr.bf16.mxu0 %v272
    %1425 = vmatpush1.bf16.msra.mxu0 %v271
    %1426 = vmatprep.subr.bf16.mxu0 %v268
    %1427 = vmatpush1.bf16.msra.mxu0 %v267
    %1428 = vmatprep.subr.bf16.mxu0 %v264
    %1429 = vmatpush1.bf16.msra.mxu0 %v263
    %1430 = vmatprep.subr.bf16.mxu0 %v260
    %1431 = vmatpush1.bf16.msra.mxu0 %v259
    %1432 = vmatprep.subr.bf16.mxu0 %v256
    %1433 = vmatpush1.bf16.msra.mxu0 %v255
    %1434 = vmatprep.subr.bf16.mxu0 %v252
    %1435 = vmatpush1.bf16.msra.mxu0 %v251
    %1436 = vmatprep.subr.bf16.mxu0 %v248
    %1437 = vmatpush1.bf16.msra.mxu0 %v247
    %1438 = vmatprep.subr.bf16.mxu0 %v244
    %1439 = vmatpush1.bf16.msra.mxu0 %v243
    %1440 = vmatprep.subr.bf16.mxu0 0
    %1441 = vmatpush2.bf16.msra.mxu0 0
    %1442 = vmatprep.subr.bf16.mxu0 0
    %1443 = vmatpush2.bf16.msra.mxu0 0
    %1444 = vmatprep.subr.bf16.mxu0 0
    %1445 = vmatpush2.bf16.msra.mxu0 0
    %1446 = vmatprep.subr.bf16.mxu0 0
    %1447 = vmatpush2.bf16.msra.mxu0 0
    %1448 = vmatprep.subr.bf16.mxu0 0
    %1449 = vmatpush2.bf16.msra.mxu0 0
    %1450 = vmatprep.subr.bf16.mxu0 0
    %1451 = vmatpush2.bf16.msra.mxu0 0
    %1452 = vmatprep.subr.bf16.mxu0 0
    %1453 = vmatpush2.bf16.msra.mxu0 0
    %1454 = vmatprep.subr.bf16.mxu0 0
    %1455 = vmatpush2.bf16.msra.mxu0 0
    %1456 = vmatprep.mubr.bf16.mxu0 0
    %1457 = vmatmul.mubr.bf16.gmra.mxu0 %v1423
    %v1458 = vpop.f32.mrf.mxu0
    %v1459 = vadd.f32 %v311, %v1458
    %v1460 = vpop.f32.mrf.mxu0
    %v1461 = vadd.f32 %v315, %v1460
    %v1462 = vpop.f32.mrf.mxu0
    %v1463 = vpop.f32.mrf.mxu0
    %1464 = vdwg.mxu0
    %1465 = vmatprep.subr.bf16.mxu0 %v274
    %1466 = vmatpush1.bf16.msra.mxu0 %v273
    %1467 = vmatprep.subr.bf16.mxu0 %v270
    %1468 = vmatpush1.bf16.msra.mxu0 %v269
    %1469 = vmatprep.subr.bf16.mxu0 %v266
    %1470 = vmatpush1.bf16.msra.mxu0 %v265
    %1471 = vmatprep.subr.bf16.mxu0 %v262
    %1472 = vmatpush1.bf16.msra.mxu0 %v261
    %1473 = vmatprep.subr.bf16.mxu0 %v258
    %1474 = vmatpush1.bf16.msra.mxu0 %v257
    %1475 = vmatprep.subr.bf16.mxu0 %v254
    %1476 = vmatpush1.bf16.msra.mxu0 %v253
    %1477 = vmatprep.subr.bf16.mxu0 %v250
    %1478 = vmatpush1.bf16.msra.mxu0 %v249
    %1479 = vmatprep.subr.bf16.mxu0 %v246
    %1480 = vmatpush1.bf16.msra.mxu0 %v245
    %1481 = vmatprep.subr.bf16.mxu0 0
    %1482 = vmatpush2.bf16.msra.mxu0 0
    %1483 = vmatprep.subr.bf16.mxu0 0
    %1484 = vmatpush2.bf16.msra.mxu0 0
    %1485 = vmatprep.subr.bf16.mxu0 0
    %1486 = vmatpush2.bf16.msra.mxu0 0
    %1487 = vmatprep.subr.bf16.mxu0 0
    %1488 = vmatpush2.bf16.msra.mxu0 0
    %1489 = vmatprep.subr.bf16.mxu0 0
    %1490 = vmatpush2.bf16.msra.mxu0 0
    %1491 = vmatprep.subr.bf16.mxu0 0
    %1492 = vmatpush2.bf16.msra.mxu0 0
    %1493 = vmatprep.subr.bf16.mxu0 0
    %1494 = vmatpush2.bf16.msra.mxu0 0
    %1495 = vmatprep.subr.bf16.mxu0 0
    %1496 = vmatpush2.bf16.msra.mxu0 0
    %1497 = vmatprep.mubr.bf16.mxu0 0
    %1498 = vmatmul.mubr.bf16.gmra.mxu0 %v1423
    %v1499 = vpop.f32.mrf.mxu0
    %v1500 = vadd.f32 %v319, %v1499
    %v1501 = vpop.f32.mrf.mxu0
    %v1502 = vadd.f32 %v323, %v1501
    %v1503 = vpop.f32.mrf.mxu0
    %v1504 = vpop.f32.mrf.mxu0
    %1505 = vdwg.mxu0
    %v1506 = vxor.u32 %v1459, 2147483648
    %v1507 = vxor.u32 %v1461, 2147483648
    %v1508 = vxor.u32 %v1500, 2147483648
    %v1509 = vmul.f32 %v1506, 1.442695
    %v1510 = vpow.pop %v1509
    %v1511 = vmul.f32 %v1507, 1.442695
    %v1512 = vpow.pop %v1511
    %v1513 = vmul.f32 %v1508, 1.442695
    %v1514 = vpow.pop %v1513
    %v1515 = vadd.f32 %v1510, 1.0
    %v1516 = vadd.f32 %v1512, 1.0
    %v1517 = vadd.f32 %v1514, 1.0
    %v1518 = vrcp.pop %v1515
    %v1519 = vmul.f32 1.0, %v1518
    %v1520 = vrcp.pop %v1516
    %v1521 = vmul.f32 1.0, %v1520
    %v1522 = vrcp.pop %v1517
    %v1523 = vmul.f32 1.0, %v1522
    %v1524 = vtanh.pop %v1502
    %v1525 = vmul.f32 %v1521, %v1277
    %v1526 = vmul.f32 %v1519, %v1524
    %v1527 = vadd.f32 %v1525, %v1526
    %v1528 = vtanh.pop %v1527
    %v1529 = vmul.f32 %v1523, %v1528
    %s1530 = sld [smem:[#allocation2 + $0x5]]
    %v1531 = vstv %s1530
    %v1532 = vmul.f32 %v1531, %v87
    %v1533 = vadd.f32 %v1532, %v88
    %v1534 = vpack.c.bf16 %v1419, %v1419
    %v1536 = vsel %vm534, %v1534, 0
    %1538 = vmatprep.subr.bf16.mxu0 0
    %1539 = vmatpush1.bf16.msra.mxu0 0
    %1540 = vmatprep.subr.bf16.mxu0 0
    %1541 = vmatpush1.bf16.msra.mxu0 0
    %1542 = vmatprep.subr.bf16.mxu0 0
    %1543 = vmatpush1.bf16.msra.mxu0 0
    %1544 = vmatprep.subr.bf16.mxu0 0
    %1545 = vmatpush1.bf16.msra.mxu0 0
    %1546 = vmatprep.subr.bf16.mxu0 %v515
    %1547 = vmatpush1.bf16.msra.mxu0 %v514
    %1548 = vmatprep.subr.bf16.mxu0 %v511
    %1549 = vmatpush1.bf16.msra.mxu0 %v510
    %1550 = vmatprep.subr.bf16.mxu0 %v507
    %1551 = vmatpush1.bf16.msra.mxu0 %v506
    %1552 = vmatprep.subr.bf16.mxu0 %v503
    %1553 = vmatpush1.bf16.msra.mxu0 %v502
    %1554 = vmatprep.subr.bf16.mxu0 0
    %1555 = vmatpush2.bf16.msra.mxu0 0
    %1556 = vmatprep.subr.bf16.mxu0 0
    %1557 = vmatpush2.bf16.msra.mxu0 0
    %1558 = vmatprep.subr.bf16.mxu0 0
    %1559 = vmatpush2.bf16.msra.mxu0 0
    %1560 = vmatprep.subr.bf16.mxu0 0
    %1561 = vmatpush2.bf16.msra.mxu0 0
    %1562 = vmatprep.subr.bf16.mxu0 0
    %1563 = vmatpush2.bf16.msra.mxu0 0
    %1564 = vmatprep.subr.bf16.mxu0 0
    %1565 = vmatpush2.bf16.msra.mxu0 0
    %1566 = vmatprep.subr.bf16.mxu0 0
    %1567 = vmatpush2.bf16.msra.mxu0 0
    %1568 = vmatprep.subr.bf16.mxu0 0
    %1569 = vmatpush2.bf16.msra.mxu0 0
    %1570 = vmatprep.mubr.bf16.mxu0 0
    %1571 = vmatmul.mubr.bf16.gmra.mxu0 %v1536
    %v1572 = vpop.f32.mrf.mxu0
    %v1573 = vadd.f32 0.0, %v1572
    %v1574 = vpop.f32.mrf.mxu0
    %v1575 = vadd.f32 0.0, %v1574
    %v1576 = vpop.f32.mrf.mxu0
    %v1577 = vpop.f32.mrf.mxu0
    %1578 = vdwg.mxu0
    %1579 = vmatprep.subr.bf16.mxu0 0
    %1580 = vmatpush1.bf16.msra.mxu0 0
    %1581 = vmatprep.subr.bf16.mxu0 0
    %1582 = vmatpush1.bf16.msra.mxu0 0
    %1583 = vmatprep.subr.bf16.mxu0 0
    %1584 = vmatpush1.bf16.msra.mxu0 0
    %1585 = vmatprep.subr.bf16.mxu0 0
    %1586 = vmatpush1.bf16.msra.mxu0 0
    %1587 = vmatprep.subr.bf16.mxu0 %v517
    %1588 = vmatpush1.bf16.msra.mxu0 %v516
    %1589 = vmatprep.subr.bf16.mxu0 %v513
    %1590 = vmatpush1.bf16.msra.mxu0 %v512
    %1591 = vmatprep.subr.bf16.mxu0 %v509
    %1592 = vmatpush1.bf16.msra.mxu0 %v508
    %1593 = vmatprep.subr.bf16.mxu0 %v505
    %1594 = vmatpush1.bf16.msra.mxu0 %v504
    %1595 = vmatprep.subr.bf16.mxu0 0
    %1596 = vmatpush2.bf16.msra.mxu0 0
    %1597 = vmatprep.subr.bf16.mxu0 0
    %1598 = vmatpush2.bf16.msra.mxu0 0
    %1599 = vmatprep.subr.bf16.mxu0 0
    %1600 = vmatpush2.bf16.msra.mxu0 0
    %1601 = vmatprep.subr.bf16.mxu0 0
    %1602 = vmatpush2.bf16.msra.mxu0 0
    %1603 = vmatprep.subr.bf16.mxu0 0
    %1604 = vmatpush2.bf16.msra.mxu0 0
    %1605 = vmatprep.subr.bf16.mxu0 0
    %1606 = vmatpush2.bf16.msra.mxu0 0
    %1607 = vmatprep.subr.bf16.mxu0 0
    %1608 = vmatpush2.bf16.msra.mxu0 0
    %1609 = vmatprep.subr.bf16.mxu0 0
    %1610 = vmatpush2.bf16.msra.mxu0 0
    %1611 = vmatprep.mubr.bf16.mxu0 0
    %1612 = vmatmul.mubr.bf16.gmra.mxu0 %v1536
    %v1613 = vpop.f32.mrf.mxu0
    %v1614 = vadd.f32 0.0, %v1613
    %v1615 = vpop.f32.mrf.mxu0
    %v1616 = vadd.f32 0.0, %v1615
    %v1617 = vpop.f32.mrf.mxu0
    %v1618 = vpop.f32.mrf.mxu0
    %1619 = vdwg.mxu0
    %v1624 = vcombine.low %v1573, %v1575
    %v1625 = vcombine.low %v1614, %v1616
    %v1627 = vunpack.c.l.s4 1966171168
    %v1628 = vunpack.c.0.s8 %v1627
    %v1629 = vlaneseq
    %v1630 = vshrl.u32 %v1629, 7
    %v1631 = vsub.s32 %v1628, %v1630
    %v1632 = vrot.slane %v1624, %v1631
    %v1634 = vunpack.c.l.s4 1966171168
    %v1635 = vunpack.c.0.s8 %v1634
    %v1636 = vlaneseq
    %v1637 = vshrl.u32 %v1636, 7
    %v1638 = vsub.s32 %v1635, %v1637
    %v1639 = vrot.slane %v1625, %v1638
    %v1640 = vcombine.low %v1632, %v1639
    %v1642 = vunpack.c.l.s4 1966171168
    %v1643 = vunpack.c.0.s8 %v1642
    %v1644 = vlaneseq
    %v1645 = vshrl.u32 %v1644, 7
    %v1646 = vsub.s32 %v1643, %v1645
    %v1647 = vrot.slane %v1640, %v1646
    %v1649 = vadd.f32 %v1533, %v1647
    %v1650 = vxor.u32 %v1649, 2147483648
    %v1651 = vmul.f32 %v1650, 1.442695
    %v1652 = vpow.pop %v1651
    %v1653 = vadd.f32 %v1652, 1.0
    %v1654 = vrcp.pop %v1653
    %v1655 = vmul.f32 1.0, %v1654
    %v1657 = vrot.slane %v1649, 3
    %v1659 = vtanh.pop %v1657
    %v1661 = vrot.slane %v1655, 1
    %v1663 = vmul.f32 %v1661, %v1415
    %v1664 = vmul.f32 %v1655, %v1659
    %v1665 = vadd.f32 %v1663, %v1664
    %v1666 = vtanh.pop %v1665
    %v1667 = vrot.slane %v1655, 2
    %v1669 = vmul.f32 %v1667, %v1666
    %1670 = vrot.lane.b32.xlu0 %v1529, 64
    %v1671 = vpop.permute.xlu0 %1670
    %v1672 = vadd.f32 %v1669, %v1671
    %v1673 = vpack.c.bf16 %v1672, %v1672
    %1674 = vmatprep.subr.bf16.mxu0 %v272
    %1675 = vmatpush1.bf16.msra.mxu0 %v271
    %1676 = vmatprep.subr.bf16.mxu0 %v268
    %1677 = vmatpush1.bf16.msra.mxu0 %v267
    %1678 = vmatprep.subr.bf16.mxu0 %v264
    %1679 = vmatpush1.bf16.msra.mxu0 %v263
    %1680 = vmatprep.subr.bf16.mxu0 %v260
    %1681 = vmatpush1.bf16.msra.mxu0 %v259
    %1682 = vmatprep.subr.bf16.mxu0 %v256
    %1683 = vmatpush1.bf16.msra.mxu0 %v255
    %1684 = vmatprep.subr.bf16.mxu0 %v252
    %1685 = vmatpush1.bf16.msra.mxu0 %v251
    %1686 = vmatprep.subr.bf16.mxu0 %v248
    %1687 = vmatpush1.bf16.msra.mxu0 %v247
    %1688 = vmatprep.subr.bf16.mxu0 %v244
    %1689 = vmatpush1.bf16.msra.mxu0 %v243
    %1690 = vmatprep.subr.bf16.mxu0 0
    %1691 = vmatpush2.bf16.msra.mxu0 0
    %1692 = vmatprep.subr.bf16.mxu0 0
    %1693 = vmatpush2.bf16.msra.mxu0 0
    %1694 = vmatprep.subr.bf16.mxu0 0
    %1695 = vmatpush2.bf16.msra.mxu0 0
    %1696 = vmatprep.subr.bf16.mxu0 0
    %1697 = vmatpush2.bf16.msra.mxu0 0
    %1698 = vmatprep.subr.bf16.mxu0 0
    %1699 = vmatpush2.bf16.msra.mxu0 0
    %1700 = vmatprep.subr.bf16.mxu0 0
    %1701 = vmatpush2.bf16.msra.mxu0 0
    %1702 = vmatprep.subr.bf16.mxu0 0
    %1703 = vmatpush2.bf16.msra.mxu0 0
    %1704 = vmatprep.subr.bf16.mxu0 0
    %1705 = vmatpush2.bf16.msra.mxu0 0
    %1706 = vmatprep.mubr.bf16.mxu0 0
    %1707 = vmatmul.mubr.bf16.gmra.mxu0 %v1673
    %v1708 = vpop.f32.mrf.mxu0
    %v1709 = vadd.f32 %v311, %v1708
    %v1710 = vpop.f32.mrf.mxu0
    %v1711 = vadd.f32 %v315, %v1710
    %v1712 = vpop.f32.mrf.mxu0
    %v1713 = vpop.f32.mrf.mxu0
    %1714 = vdwg.mxu0
    %1715 = vmatprep.subr.bf16.mxu0 %v274
    %1716 = vmatpush1.bf16.msra.mxu0 %v273
    %1717 = vmatprep.subr.bf16.mxu0 %v270
    %1718 = vmatpush1.bf16.msra.mxu0 %v269
    %1719 = vmatprep.subr.bf16.mxu0 %v266
    %1720 = vmatpush1.bf16.msra.mxu0 %v265
    %1721 = vmatprep.subr.bf16.mxu0 %v262
    %1722 = vmatpush1.bf16.msra.mxu0 %v261
    %1723 = vmatprep.subr.bf16.mxu0 %v258
    %1724 = vmatpush1.bf16.msra.mxu0 %v257
    %1725 = vmatprep.subr.bf16.mxu0 %v254
    %1726 = vmatpush1.bf16.msra.mxu0 %v253
    %1727 = vmatprep.subr.bf16.mxu0 %v250
    %1728 = vmatpush1.bf16.msra.mxu0 %v249
    %1729 = vmatprep.subr.bf16.mxu0 %v246
    %1730 = vmatpush1.bf16.msra.mxu0 %v245
    %1731 = vmatprep.subr.bf16.mxu0 0
    %1732 = vmatpush2.bf16.msra.mxu0 0
    %1733 = vmatprep.subr.bf16.mxu0 0
    %1734 = vmatpush2.bf16.msra.mxu0 0
    %1735 = vmatprep.subr.bf16.mxu0 0
    %1736 = vmatpush2.bf16.msra.mxu0 0
    %1737 = vmatprep.subr.bf16.mxu0 0
    %1738 = vmatpush2.bf16.msra.mxu0 0
    %1739 = vmatprep.subr.bf16.mxu0 0
    %1740 = vmatpush2.bf16.msra.mxu0 0
    %1741 = vmatprep.subr.bf16.mxu0 0
    %1742 = vmatpush2.bf16.msra.mxu0 0
    %1743 = vmatprep.subr.bf16.mxu0 0
    %1744 = vmatpush2.bf16.msra.mxu0 0
    %1745 = vmatprep.subr.bf16.mxu0 0
    %1746 = vmatpush2.bf16.msra.mxu0 0
    %1747 = vmatprep.mubr.bf16.mxu0 0
    %1748 = vmatmul.mubr.bf16.gmra.mxu0 %v1673
    %v1749 = vpop.f32.mrf.mxu0
    %v1750 = vadd.f32 %v319, %v1749
    %v1751 = vpop.f32.mrf.mxu0
    %v1752 = vadd.f32 %v323, %v1751
    %v1753 = vpop.f32.mrf.mxu0
    %v1754 = vpop.f32.mrf.mxu0
    %1755 = vdwg.mxu0
    %v1756 = vxor.u32 %v1709, 2147483648
    %v1757 = vxor.u32 %v1711, 2147483648
    %v1758 = vxor.u32 %v1750, 2147483648
    %v1759 = vmul.f32 %v1756, 1.442695
    %v1760 = vpow.pop %v1759
    %v1761 = vmul.f32 %v1757, 1.442695
    %v1762 = vpow.pop %v1761
    %v1763 = vmul.f32 %v1758, 1.442695
    %v1764 = vpow.pop %v1763
    %v1765 = vadd.f32 %v1760, 1.0
    %v1766 = vadd.f32 %v1762, 1.0
    %v1767 = vadd.f32 %v1764, 1.0
    %v1768 = vrcp.pop %v1765
    %v1769 = vmul.f32 1.0, %v1768
    %v1770 = vrcp.pop %v1766
    %v1771 = vmul.f32 1.0, %v1770
    %v1772 = vrcp.pop %v1767
    %v1773 = vmul.f32 1.0, %v1772
    %v1774 = vtanh.pop %v1752
    %v1775 = vmul.f32 %v1771, %v1527
    %v1776 = vmul.f32 %v1769, %v1774
    %v1777 = vadd.f32 %v1775, %v1776
    %v1778 = vtanh.pop %v1777
    %v1779 = vmul.f32 %v1773, %v1778
    %s1780 = sld [smem:[#allocation2 + $0x6]]
    %v1781 = vstv %s1780
    %v1782 = vmul.f32 %v1781, %v87
    %v1783 = vadd.f32 %v1782, %v88
    %v1784 = vpack.c.bf16 %v1669, %v1669
    %v1786 = vsel %vm534, %v1784, 0
    %1788 = vmatprep.subr.bf16.mxu0 0
    %1789 = vmatpush1.bf16.msra.mxu0 0
    %1790 = vmatprep.subr.bf16.mxu0 0
    %1791 = vmatpush1.bf16.msra.mxu0 0
    %1792 = vmatprep.subr.bf16.mxu0 0
    %1793 = vmatpush1.bf16.msra.mxu0 0
    %1794 = vmatprep.subr.bf16.mxu0 0
    %1795 = vmatpush1.bf16.msra.mxu0 0
    %1796 = vmatprep.subr.bf16.mxu0 %v515
    %1797 = vmatpush1.bf16.msra.mxu0 %v514
    %1798 = vmatprep.subr.bf16.mxu0 %v511
    %1799 = vmatpush1.bf16.msra.mxu0 %v510
    %1800 = vmatprep.subr.bf16.mxu0 %v507
    %1801 = vmatpush1.bf16.msra.mxu0 %v506
    %1802 = vmatprep.subr.bf16.mxu0 %v503
    %1803 = vmatpush1.bf16.msra.mxu0 %v502
    %1804 = vmatprep.subr.bf16.mxu0 0
    %1805 = vmatpush2.bf16.msra.mxu0 0
    %1806 = vmatprep.subr.bf16.mxu0 0
    %1807 = vmatpush2.bf16.msra.mxu0 0
    %1808 = vmatprep.subr.bf16.mxu0 0
    %1809 = vmatpush2.bf16.msra.mxu0 0
    %1810 = vmatprep.subr.bf16.mxu0 0
    %1811 = vmatpush2.bf16.msra.mxu0 0
    %1812 = vmatprep.subr.bf16.mxu0 0
    %1813 = vmatpush2.bf16.msra.mxu0 0
    %1814 = vmatprep.subr.bf16.mxu0 0
    %1815 = vmatpush2.bf16.msra.mxu0 0
    %1816 = vmatprep.subr.bf16.mxu0 0
    %1817 = vmatpush2.bf16.msra.mxu0 0
    %1818 = vmatprep.subr.bf16.mxu0 0
    %1819 = vmatpush2.bf16.msra.mxu0 0
    %1820 = vmatprep.mubr.bf16.mxu0 0
    %1821 = vmatmul.mubr.bf16.gmra.mxu0 %v1786
    %v1822 = vpop.f32.mrf.mxu0
    %v1823 = vadd.f32 0.0, %v1822
    %v1824 = vpop.f32.mrf.mxu0
    %v1825 = vadd.f32 0.0, %v1824
    %v1826 = vpop.f32.mrf.mxu0
    %v1827 = vpop.f32.mrf.mxu0
    %1828 = vdwg.mxu0
    %1829 = vmatprep.subr.bf16.mxu0 0
    %1830 = vmatpush1.bf16.msra.mxu0 0
    %1831 = vmatprep.subr.bf16.mxu0 0
    %1832 = vmatpush1.bf16.msra.mxu0 0
    %1833 = vmatprep.subr.bf16.mxu0 0
    %1834 = vmatpush1.bf16.msra.mxu0 0
    %1835 = vmatprep.subr.bf16.mxu0 0
    %1836 = vmatpush1.bf16.msra.mxu0 0
    %1837 = vmatprep.subr.bf16.mxu0 %v517
    %1838 = vmatpush1.bf16.msra.mxu0 %v516
    %1839 = vmatprep.subr.bf16.mxu0 %v513
    %1840 = vmatpush1.bf16.msra.mxu0 %v512
    %1841 = vmatprep.subr.bf16.mxu0 %v509
    %1842 = vmatpush1.bf16.msra.mxu0 %v508
    %1843 = vmatprep.subr.bf16.mxu0 %v505
    %1844 = vmatpush1.bf16.msra.mxu0 %v504
    %1845 = vmatprep.subr.bf16.mxu0 0
    %1846 = vmatpush2.bf16.msra.mxu0 0
    %1847 = vmatprep.subr.bf16.mxu0 0
    %1848 = vmatpush2.bf16.msra.mxu0 0
    %1849 = vmatprep.subr.bf16.mxu0 0
    %1850 = vmatpush2.bf16.msra.mxu0 0
    %1851 = vmatprep.subr.bf16.mxu0 0
    %1852 = vmatpush2.bf16.msra.mxu0 0
    %1853 = vmatprep.subr.bf16.mxu0 0
    %1854 = vmatpush2.bf16.msra.mxu0 0
    %1855 = vmatprep.subr.bf16.mxu0 0
    %1856 = vmatpush2.bf16.msra.mxu0 0
    %1857 = vmatprep.subr.bf16.mxu0 0
    %1858 = vmatpush2.bf16.msra.mxu0 0
    %1859 = vmatprep.subr.bf16.mxu0 0
    %1860 = vmatpush2.bf16.msra.mxu0 0
    %1861 = vmatprep.mubr.bf16.mxu0 0
    %1862 = vmatmul.mubr.bf16.gmra.mxu0 %v1786
    %v1863 = vpop.f32.mrf.mxu0
    %v1864 = vadd.f32 0.0, %v1863
    %v1865 = vpop.f32.mrf.mxu0
    %v1866 = vadd.f32 0.0, %v1865
    %v1867 = vpop.f32.mrf.mxu0
    %v1868 = vpop.f32.mrf.mxu0
    %1869 = vdwg.mxu0
    %v1874 = vcombine.low %v1823, %v1825
    %v1875 = vcombine.low %v1864, %v1866
    %v1877 = vunpack.c.l.s4 1966171168
    %v1878 = vunpack.c.0.s8 %v1877
    %v1879 = vlaneseq
    %v1880 = vshrl.u32 %v1879, 7
    %v1881 = vsub.s32 %v1878, %v1880
    %v1882 = vrot.slane %v1874, %v1881
    %v1884 = vunpack.c.l.s4 1966171168
    %v1885 = vunpack.c.0.s8 %v1884
    %v1886 = vlaneseq
    %v1887 = vshrl.u32 %v1886, 7
    %v1888 = vsub.s32 %v1885, %v1887
    %v1889 = vrot.slane %v1875, %v1888
    %v1890 = vcombine.low %v1882, %v1889
    %v1892 = vunpack.c.l.s4 1966171168
    %v1893 = vunpack.c.0.s8 %v1892
    %v1894 = vlaneseq
    %v1895 = vshrl.u32 %v1894, 7
    %v1896 = vsub.s32 %v1893, %v1895
    %v1897 = vrot.slane %v1890, %v1896
    %v1899 = vadd.f32 %v1783, %v1897
    %v1900 = vxor.u32 %v1899, 2147483648
    %v1901 = vmul.f32 %v1900, 1.442695
    %v1902 = vpow.pop %v1901
    %v1903 = vadd.f32 %v1902, 1.0
    %v1904 = vrcp.pop %v1903
    %v1905 = vmul.f32 1.0, %v1904
    %v1907 = vrot.slane %v1899, 3
    %v1909 = vtanh.pop %v1907
    %v1911 = vrot.slane %v1905, 1
    %v1913 = vmul.f32 %v1911, %v1665
    %v1914 = vmul.f32 %v1905, %v1909
    %v1915 = vadd.f32 %v1913, %v1914
    %v1916 = vtanh.pop %v1915
    %v1917 = vrot.slane %v1905, 2
    %v1919 = vmul.f32 %v1917, %v1916
    %1920 = vrot.lane.b32.xlu0 %v1779, 64
    %v1921 = vpop.permute.xlu0 %1920
    %v1922 = vadd.f32 %v1919, %v1921
    %v1923 = vpack.c.bf16 %v1922, %v1922
    %1924 = vmatprep.subr.bf16.mxu0 %v272
    %1925 = vmatpush1.bf16.msra.mxu0 %v271
    %1926 = vmatprep.subr.bf16.mxu0 %v268
    %1927 = vmatpush1.bf16.msra.mxu0 %v267
    %1928 = vmatprep.subr.bf16.mxu0 %v264
    %1929 = vmatpush1.bf16.msra.mxu0 %v263
    %1930 = vmatprep.subr.bf16.mxu0 %v260
    %1931 = vmatpush1.bf16.msra.mxu0 %v259
    %1932 = vmatprep.subr.bf16.mxu0 %v256
    %1933 = vmatpush1.bf16.msra.mxu0 %v255
    %1934 = vmatprep.subr.bf16.mxu0 %v252
    %1935 = vmatpush1.bf16.msra.mxu0 %v251
    %1936 = vmatprep.subr.bf16.mxu0 %v248
    %1937 = vmatpush1.bf16.msra.mxu0 %v247
    %1938 = vmatprep.subr.bf16.mxu0 %v244
    %1939 = vmatpush1.bf16.msra.mxu0 %v243
    %1940 = vmatprep.subr.bf16.mxu0 0
    %1941 = vmatpush2.bf16.msra.mxu0 0
    %1942 = vmatprep.subr.bf16.mxu0 0
    %1943 = vmatpush2.bf16.msra.mxu0 0
    %1944 = vmatprep.subr.bf16.mxu0 0
    %1945 = vmatpush2.bf16.msra.mxu0 0
    %1946 = vmatprep.subr.bf16.mxu0 0
    %1947 = vmatpush2.bf16.msra.mxu0 0
    %1948 = vmatprep.subr.bf16.mxu0 0
    %1949 = vmatpush2.bf16.msra.mxu0 0
    %1950 = vmatprep.subr.bf16.mxu0 0
    %1951 = vmatpush2.bf16.msra.mxu0 0
    %1952 = vmatprep.subr.bf16.mxu0 0
    %1953 = vmatpush2.bf16.msra.mxu0 0
    %1954 = vmatprep.subr.bf16.mxu0 0
    %1955 = vmatpush2.bf16.msra.mxu0 0
    %1956 = vmatprep.mubr.bf16.mxu0 0
    %1957 = vmatmul.mubr.bf16.gmra.mxu0 %v1923
    %v1958 = vpop.f32.mrf.mxu0
    %v1959 = vadd.f32 %v311, %v1958
    %v1960 = vpop.f32.mrf.mxu0
    %v1961 = vadd.f32 %v315, %v1960
    %v1962 = vpop.f32.mrf.mxu0
    %v1963 = vpop.f32.mrf.mxu0
    %1964 = vdwg.mxu0
    %1965 = vmatprep.subr.bf16.mxu0 %v274
    %1966 = vmatpush1.bf16.msra.mxu0 %v273
    %1967 = vmatprep.subr.bf16.mxu0 %v270
    %1968 = vmatpush1.bf16.msra.mxu0 %v269
    %1969 = vmatprep.subr.bf16.mxu0 %v266
    %1970 = vmatpush1.bf16.msra.mxu0 %v265
    %1971 = vmatprep.subr.bf16.mxu0 %v262
    %1972 = vmatpush1.bf16.msra.mxu0 %v261
    %1973 = vmatprep.subr.bf16.mxu0 %v258
    %1974 = vmatpush1.bf16.msra.mxu0 %v257
    %1975 = vmatprep.subr.bf16.mxu0 %v254
    %1976 = vmatpush1.bf16.msra.mxu0 %v253
    %1977 = vmatprep.subr.bf16.mxu0 %v250
    %1978 = vmatpush1.bf16.msra.mxu0 %v249
    %1979 = vmatprep.subr.bf16.mxu0 %v246
    %1980 = vmatpush1.bf16.msra.mxu0 %v245
    %1981 = vmatprep.subr.bf16.mxu0 0
    %1982 = vmatpush2.bf16.msra.mxu0 0
    %1983 = vmatprep.subr.bf16.mxu0 0
    %1984 = vmatpush2.bf16.msra.mxu0 0
    %1985 = vmatprep.subr.bf16.mxu0 0
    %1986 = vmatpush2.bf16.msra.mxu0 0
    %1987 = vmatprep.subr.bf16.mxu0 0
    %1988 = vmatpush2.bf16.msra.mxu0 0
    %1989 = vmatprep.subr.bf16.mxu0 0
    %1990 = vmatpush2.bf16.msra.mxu0 0
    %1991 = vmatprep.subr.bf16.mxu0 0
    %1992 = vmatpush2.bf16.msra.mxu0 0
    %1993 = vmatprep.subr.bf16.mxu0 0
    %1994 = vmatpush2.bf16.msra.mxu0 0
    %1995 = vmatprep.subr.bf16.mxu0 0
    %1996 = vmatpush2.bf16.msra.mxu0 0
    %1997 = vmatprep.mubr.bf16.mxu0 0
    %1998 = vmatmul.mubr.bf16.gmra.mxu0 %v1923
    %v1999 = vpop.f32.mrf.mxu0
    %v2000 = vadd.f32 %v319, %v1999
    %v2001 = vpop.f32.mrf.mxu0
    %v2002 = vadd.f32 %v323, %v2001
    %v2003 = vpop.f32.mrf.mxu0
    %v2004 = vpop.f32.mrf.mxu0
    %2005 = vdwg.mxu0
    %v2006 = vxor.u32 %v1959, 2147483648
    %v2007 = vxor.u32 %v1961, 2147483648
    %v2008 = vxor.u32 %v2000, 2147483648
    %v2009 = vmul.f32 %v2006, 1.442695
    %v2010 = vpow.pop %v2009
    %v2011 = vmul.f32 %v2007, 1.442695
    %v2012 = vpow.pop %v2011
    %v2013 = vmul.f32 %v2008, 1.442695
    %v2014 = vpow.pop %v2013
    %v2015 = vadd.f32 %v2010, 1.0
    %v2016 = vadd.f32 %v2012, 1.0
    %v2017 = vadd.f32 %v2014, 1.0
    %v2018 = vrcp.pop %v2015
    %v2019 = vmul.f32 1.0, %v2018
    %v2020 = vrcp.pop %v2016
    %v2021 = vmul.f32 1.0, %v2020
    %v2022 = vrcp.pop %v2017
    %v2023 = vmul.f32 1.0, %v2022
    %v2024 = vtanh.pop %v2002
    %v2025 = vmul.f32 %v2021, %v1777
    %v2026 = vmul.f32 %v2019, %v2024
    %v2027 = vadd.f32 %v2025, %v2026
    %v2028 = vtanh.pop %v2027
    %v2029 = vmul.f32 %v2023, %v2028
    %s2030 = sld [smem:[#allocation2 + $0x7]]
    %v2031 = vstv %s2030
    %v2032 = vmul.f32 %v2031, %v87
    %v2033 = vadd.f32 %v2032, %v88
    %v2034 = vpack.c.bf16 %v1919, %v1919
    %v2036 = vsel %vm534, %v2034, 0
    %2038 = vmatprep.subr.bf16.mxu0 0
    %2039 = vmatpush1.bf16.msra.mxu0 0
    %2040 = vmatprep.subr.bf16.mxu0 0
    %2041 = vmatpush1.bf16.msra.mxu0 0
    %2042 = vmatprep.subr.bf16.mxu0 0
    %2043 = vmatpush1.bf16.msra.mxu0 0
    %2044 = vmatprep.subr.bf16.mxu0 0
    %2045 = vmatpush1.bf16.msra.mxu0 0
    %2046 = vmatprep.subr.bf16.mxu0 %v515
    %2047 = vmatpush1.bf16.msra.mxu0 %v514
    %2048 = vmatprep.subr.bf16.mxu0 %v511
    %2049 = vmatpush1.bf16.msra.mxu0 %v510
    %2050 = vmatprep.subr.bf16.mxu0 %v507
    %2051 = vmatpush1.bf16.msra.mxu0 %v506
    %2052 = vmatprep.subr.bf16.mxu0 %v503
    %2053 = vmatpush1.bf16.msra.mxu0 %v502
    %2054 = vmatprep.subr.bf16.mxu0 0
    %2055 = vmatpush2.bf16.msra.mxu0 0
    %2056 = vmatprep.subr.bf16.mxu0 0
    %2057 = vmatpush2.bf16.msra.mxu0 0
    %2058 = vmatprep.subr.bf16.mxu0 0
    %2059 = vmatpush2.bf16.msra.mxu0 0
    %2060 = vmatprep.subr.bf16.mxu0 0
    %2061 = vmatpush2.bf16.msra.mxu0 0
    %2062 = vmatprep.subr.bf16.mxu0 0
    %2063 = vmatpush2.bf16.msra.mxu0 0
    %2064 = vmatprep.subr.bf16.mxu0 0
    %2065 = vmatpush2.bf16.msra.mxu0 0
    %2066 = vmatprep.subr.bf16.mxu0 0
    %2067 = vmatpush2.bf16.msra.mxu0 0
    %2068 = vmatprep.subr.bf16.mxu0 0
    %2069 = vmatpush2.bf16.msra.mxu0 0
    %2070 = vmatprep.mubr.bf16.mxu0 0
    %2071 = vmatmul.mubr.bf16.gmra.mxu0 %v2036
    %v2072 = vpop.f32.mrf.mxu0
    %v2073 = vadd.f32 0.0, %v2072
    %v2074 = vpop.f32.mrf.mxu0
    %v2075 = vadd.f32 0.0, %v2074
    %v2076 = vpop.f32.mrf.mxu0
    %v2077 = vpop.f32.mrf.mxu0
    %2078 = vdwg.mxu0
    %2079 = vmatprep.subr.bf16.mxu0 0
    %2080 = vmatpush1.bf16.msra.mxu0 0
    %2081 = vmatprep.subr.bf16.mxu0 0
    %2082 = vmatpush1.bf16.msra.mxu0 0
    %2083 = vmatprep.subr.bf16.mxu0 0
    %2084 = vmatpush1.bf16.msra.mxu0 0
    %2085 = vmatprep.subr.bf16.mxu0 0
    %2086 = vmatpush1.bf16.msra.mxu0 0
    %2087 = vmatprep.subr.bf16.mxu0 %v517
    %2088 = vmatpush1.bf16.msra.mxu0 %v516
    %2089 = vmatprep.subr.bf16.mxu0 %v513
    %2090 = vmatpush1.bf16.msra.mxu0 %v512
    %2091 = vmatprep.subr.bf16.mxu0 %v509
    %2092 = vmatpush1.bf16.msra.mxu0 %v508
    %2093 = vmatprep.subr.bf16.mxu0 %v505
    %2094 = vmatpush1.bf16.msra.mxu0 %v504
    %2095 = vmatprep.subr.bf16.mxu0 0
    %2096 = vmatpush2.bf16.msra.mxu0 0
    %2097 = vmatprep.subr.bf16.mxu0 0
    %2098 = vmatpush2.bf16.msra.mxu0 0
    %2099 = vmatprep.subr.bf16.mxu0 0
    %2100 = vmatpush2.bf16.msra.mxu0 0
    %2101 = vmatprep.subr.bf16.mxu0 0
    %2102 = vmatpush2.bf16.msra.mxu0 0
    %2103 = vmatprep.subr.bf16.mxu0 0
    %2104 = vmatpush2.bf16.msra.mxu0 0
    %2105 = vmatprep.subr.bf16.mxu0 0
    %2106 = vmatpush2.bf16.msra.mxu0 0
    %2107 = vmatprep.subr.bf16.mxu0 0
    %2108 = vmatpush2.bf16.msra.mxu0 0
    %2109 = vmatprep.subr.bf16.mxu0 0
    %2110 = vmatpush2.bf16.msra.mxu0 0
    %2111 = vmatprep.mubr.bf16.mxu0 0
    %2112 = vmatmul.mubr.bf16.gmra.mxu0 %v2036
    %v2113 = vpop.f32.mrf.mxu0
    %v2114 = vadd.f32 0.0, %v2113
    %v2115 = vpop.f32.mrf.mxu0
    %v2116 = vadd.f32 0.0, %v2115
    %v2117 = vpop.f32.mrf.mxu0
    %v2118 = vpop.f32.mrf.mxu0
    %2119 = vdwg.mxu0
    %v2124 = vcombine.low %v2073, %v2075
    %v2125 = vcombine.low %v2114, %v2116
    %v2127 = vunpack.c.l.s4 1966171168
    %v2128 = vunpack.c.0.s8 %v2127
    %v2129 = vlaneseq
    %v2130 = vshrl.u32 %v2129, 7
    %v2131 = vsub.s32 %v2128, %v2130
    %v2132 = vrot.slane %v2124, %v2131
    %v2134 = vunpack.c.l.s4 1966171168
    %v2135 = vunpack.c.0.s8 %v2134
    %v2136 = vlaneseq
    %v2137 = vshrl.u32 %v2136, 7
    %v2138 = vsub.s32 %v2135, %v2137
    %v2139 = vrot.slane %v2125, %v2138
    %v2140 = vcombine.low %v2132, %v2139
    %v2142 = vunpack.c.l.s4 1966171168
    %v2143 = vunpack.c.0.s8 %v2142
    %v2144 = vlaneseq
    %v2145 = vshrl.u32 %v2144, 7
    %v2146 = vsub.s32 %v2143, %v2145
    %v2147 = vrot.slane %v2140, %v2146
    %v2149 = vadd.f32 %v2033, %v2147
    %v2150 = vxor.u32 %v2149, 2147483648
    %v2151 = vmul.f32 %v2150, 1.442695
    %v2152 = vpow.pop %v2151
    %v2153 = vadd.f32 %v2152, 1.0
    %v2154 = vrcp.pop %v2153
    %v2155 = vmul.f32 1.0, %v2154
    %v2157 = vrot.slane %v2149, 3
    %v2159 = vtanh.pop %v2157
    %v2161 = vrot.slane %v2155, 1
    %v2163 = vmul.f32 %v2161, %v1915
    %v2164 = vmul.f32 %v2155, %v2159
    %v2165 = vadd.f32 %v2163, %v2164
    %v2166 = vtanh.pop %v2165
    %v2167 = vrot.slane %v2155, 2
    %v2169 = vmul.f32 %v2167, %v2166
    %2170 = vrot.lane.b32.xlu0 %v2029, 64
    %v2171 = vpop.permute.xlu0 %2170
    %v2172 = vadd.f32 %v2169, %v2171
    %v2173 = vpack.c.bf16 %v2172, %v2172
    %2174 = vmatprep.subr.bf16.mxu0 %v272
    %2175 = vmatpush1.bf16.msra.mxu0 %v271
    %2176 = vmatprep.subr.bf16.mxu0 %v268
    %2177 = vmatpush1.bf16.msra.mxu0 %v267
    %2178 = vmatprep.subr.bf16.mxu0 %v264
    %2179 = vmatpush1.bf16.msra.mxu0 %v263
    %2180 = vmatprep.subr.bf16.mxu0 %v260
    %2181 = vmatpush1.bf16.msra.mxu0 %v259
    %2182 = vmatprep.subr.bf16.mxu0 %v256
    %2183 = vmatpush1.bf16.msra.mxu0 %v255
    %2184 = vmatprep.subr.bf16.mxu0 %v252
    %2185 = vmatpush1.bf16.msra.mxu0 %v251
    %2186 = vmatprep.subr.bf16.mxu0 %v248
    %2187 = vmatpush1.bf16.msra.mxu0 %v247
    %2188 = vmatprep.subr.bf16.mxu0 %v244
    %2189 = vmatpush1.bf16.msra.mxu0 %v243
    %2190 = vmatprep.subr.bf16.mxu0 0
    %2191 = vmatpush2.bf16.msra.mxu0 0
    %2192 = vmatprep.subr.bf16.mxu0 0
    %2193 = vmatpush2.bf16.msra.mxu0 0
    %2194 = vmatprep.subr.bf16.mxu0 0
    %2195 = vmatpush2.bf16.msra.mxu0 0
    %2196 = vmatprep.subr.bf16.mxu0 0
    %2197 = vmatpush2.bf16.msra.mxu0 0
    %2198 = vmatprep.subr.bf16.mxu0 0
    %2199 = vmatpush2.bf16.msra.mxu0 0
    %2200 = vmatprep.subr.bf16.mxu0 0
    %2201 = vmatpush2.bf16.msra.mxu0 0
    %2202 = vmatprep.subr.bf16.mxu0 0
    %2203 = vmatpush2.bf16.msra.mxu0 0
    %2204 = vmatprep.subr.bf16.mxu0 0
    %2205 = vmatpush2.bf16.msra.mxu0 0
    %2206 = vmatprep.mubr.bf16.mxu0 0
    %2207 = vmatmul.mubr.bf16.gmra.mxu0 %v2173
    %v2208 = vpop.f32.mrf.mxu0
    %v2209 = vadd.f32 %v311, %v2208
    %v2210 = vpop.f32.mrf.mxu0
    %v2211 = vadd.f32 %v315, %v2210
    %v2212 = vpop.f32.mrf.mxu0
    %v2213 = vpop.f32.mrf.mxu0
    %2214 = vdwg.mxu0
    %2215 = vmatprep.subr.bf16.mxu0 %v274
    %2216 = vmatpush1.bf16.msra.mxu0 %v273
    %2217 = vmatprep.subr.bf16.mxu0 %v270
    %2218 = vmatpush1.bf16.msra.mxu0 %v269
    %2219 = vmatprep.subr.bf16.mxu0 %v266
    %2220 = vmatpush1.bf16.msra.mxu0 %v265
    %2221 = vmatprep.subr.bf16.mxu0 %v262
    %2222 = vmatpush1.bf16.msra.mxu0 %v261
    %2223 = vmatprep.subr.bf16.mxu0 %v258
    %2224 = vmatpush1.bf16.msra.mxu0 %v257
    %2225 = vmatprep.subr.bf16.mxu0 %v254
    %2226 = vmatpush1.bf16.msra.mxu0 %v253
    %2227 = vmatprep.subr.bf16.mxu0 %v250
    %2228 = vmatpush1.bf16.msra.mxu0 %v249
    %2229 = vmatprep.subr.bf16.mxu0 %v246
    %2230 = vmatpush1.bf16.msra.mxu0 %v245
    %2231 = vmatprep.subr.bf16.mxu0 0
    %2232 = vmatpush2.bf16.msra.mxu0 0
    %2233 = vmatprep.subr.bf16.mxu0 0
    %2234 = vmatpush2.bf16.msra.mxu0 0
    %2235 = vmatprep.subr.bf16.mxu0 0
    %2236 = vmatpush2.bf16.msra.mxu0 0
    %2237 = vmatprep.subr.bf16.mxu0 0
    %2238 = vmatpush2.bf16.msra.mxu0 0
    %2239 = vmatprep.subr.bf16.mxu0 0
    %2240 = vmatpush2.bf16.msra.mxu0 0
    %2241 = vmatprep.subr.bf16.mxu0 0
    %2242 = vmatpush2.bf16.msra.mxu0 0
    %2243 = vmatprep.subr.bf16.mxu0 0
    %2244 = vmatpush2.bf16.msra.mxu0 0
    %2245 = vmatprep.subr.bf16.mxu0 0
    %2246 = vmatpush2.bf16.msra.mxu0 0
    %2247 = vmatprep.mubr.bf16.mxu0 0
    %2248 = vmatmul.mubr.bf16.gmra.mxu0 %v2173
    %v2249 = vpop.f32.mrf.mxu0
    %v2250 = vadd.f32 %v319, %v2249
    %v2251 = vpop.f32.mrf.mxu0
    %v2252 = vadd.f32 %v323, %v2251
    %v2253 = vpop.f32.mrf.mxu0
    %v2254 = vpop.f32.mrf.mxu0
    %2255 = vdwg.mxu0
    %v2256 = vxor.u32 %v2209, 2147483648
    %v2257 = vxor.u32 %v2211, 2147483648
    %v2258 = vxor.u32 %v2250, 2147483648
    %v2259 = vmul.f32 %v2256, 1.442695
    %v2260 = vpow.pop %v2259
    %v2261 = vmul.f32 %v2257, 1.442695
    %v2262 = vpow.pop %v2261
    %v2263 = vmul.f32 %v2258, 1.442695
    %v2264 = vpow.pop %v2263
    %v2265 = vadd.f32 %v2260, 1.0
    %v2266 = vadd.f32 %v2262, 1.0
    %v2267 = vadd.f32 %v2264, 1.0
    %v2268 = vrcp.pop %v2265
    %v2269 = vmul.f32 1.0, %v2268
    %v2270 = vrcp.pop %v2266
    %v2271 = vmul.f32 1.0, %v2270
    %v2272 = vrcp.pop %v2267
    %v2273 = vmul.f32 1.0, %v2272
    %v2274 = vtanh.pop %v2252
    %v2275 = vmul.f32 %v2271, %v2027
    %v2276 = vmul.f32 %v2269, %v2274
    %v2277 = vadd.f32 %v2275, %v2276
    %v2278 = vtanh.pop %v2277
    %v2279 = vmul.f32 %v2273, %v2278
    %2280 = vst [vmem:[#allocation12] sm:$0x1] %v2279
    // Predicated region
    $region46: #{tpu_custom_call.1} parent=1 // pred_check
      _
    $region47: #{tpu_custom_call.1} parent=1 // pred_check_branch
      %2282 = sbr.rel (0) target = $region49
    $region48: #{tpu_custom_call.1} parent=1 // pred_region
      %s2284 = ssub.s32 16, 16
      %2285 = vsyncadd [#allocation4], %s2284
      %s2287 = sshll.u32 [#allocation12], 4
      %s2288 = int_to_ptr.vmem [resolvable:$true] %s2287
      %2290 = dma.vmem_to_hbm [thread:$0]  %s2288, 16, %s6, [#allocation4]
    $region49: #{tpu_custom_call.1} parent=1 // pred_fallthru
      _
    // Predicated region
    $region50: #{tpu_custom_call.1} parent=1 // pred_check
      _
    $region51: #{tpu_custom_call.1} parent=1 // pred_check_branch
      %2292 = sbr.rel (0) target = $region53
    $region52: #{tpu_custom_call.1} parent=1 // pred_region
      %2293 = dma.done [#allocation4], 16
    $region53: #{tpu_custom_call.1} parent=1 // pred_fallthru
      _
    %2294 = vsyncpa [#allocation3], 1
    %2295 = vsyncpa [#allocation8], 1
    %2296 = vsyncpa [#allocation11], 1
    %2297 = vsyncpa [#allocation4], 1
    %2298 = vsyncpa [#allocation5], 1

</llo_original>
